<compile_context>
chip_gen: v7x
topology: tpu7x:2x2x1
jax: 0.10.0
libtpu: 0.0.40
codegen_flags: <defaults>
</compile_context>

<pallas_src>
import functools

import numpy as np
import jax
import jax.numpy as jnp
from jax.experimental import pallas as pl
from jax.experimental.pallas import tpu as pltpu


def _spectral_normalize(w, n_iter=10):
    """Spectral norm via deterministic power iteration (PyTorch spectral_norm's
    fixed point). PyTorch keeps persistent u/v buffers and does one step per
    forward; weights are static per call here, so a few iterations in the wrapper
    are equivalent and avoid an SVD on the forward path."""
    m = w.reshape(w.shape[0], -1).astype(jnp.float32)
    u = jnp.ones((m.shape[0],), jnp.float32)
    u = u / jnp.linalg.norm(u)

    def body(_, u):
        v = m.T @ u
        v = v / (jnp.linalg.norm(v) + 1e-12)
        u_new = m @ v
        u_new = u_new / (jnp.linalg.norm(u_new) + 1e-12)
        return u_new

    u = jax.lax.fori_loop(0, n_iter, body, u)
    v = m.T @ u
    v = v / (jnp.linalg.norm(v) + 1e-12)
    sigma = jnp.dot(u, m @ v)
    return (w / sigma).astype(jnp.float32)


def _residual_block_kernel(x_ref, w1_ref, w2_ref, wl_ref, aff_ref, mask_ref,
                           pool_ref, out_ref, *, H, W, eps):
    # x_ref   : (1, C_in, Hp*Wp + 2)  bf16   flattened reflection-padded input (+2 slack)
    # w1_ref  : (C_out, 9*C_in)       bf16   first 3x3 conv, taps folded into K
    # w2_ref  : (C_out, 9*C_out)      bf16   second 3x3 conv
    # wl_ref  : (C_out, C_in)         bf16   left-branch 1x1 conv
    # aff_ref : (C_out, 6)            f32    [g1, b1, g2, b2, gl, bl]
    # mask_ref: (3, Hp*Wp)            f32    [valid-col(<W), col==0, col==Wp-1]
    # pool_ref: (H*Wp, Ho*Wo)         f32    AvgPool2d(3,2,1) as a matrix
    # out_ref : (1, C_out, Ho*Wo)
    Wp = W + 2
    Hp = H + 2
    L = H * Wp                      # "wide" output domain: H rows x Wp cols (cols >= W junk)
    inv_hw = 1.0 / float(H * W)

    x_flat = x_ref[0]               # (C_in, Hp*Wp + 2) bf16

    # ---- im2col in VMEM: tap (dy,dx) is a static lane slice of the flat padded image ----
    offs = [dy * Wp + dx for dy in range(3) for dx in range(3)]
    taps1 = [x_flat[:, o:o + L] for o in offs]
    p1 = jnp.concatenate(taps1, axis=0)                              # (9*C_in, L) bf16

    # ---- first 3x3 conv: single MXU matmul, K = 9*C_in, f32 accumulate ----
    y1 = jnp.dot(w1_ref[...], p1, preferred_element_type=jnp.float32)  # (C_out, L) f32

    m_valid = mask_ref[0:1, 0:L]                                     # (1, L)

    def inorm_affine_relu(y, g, b):
        # one-pass masked InstanceNorm fused with affine + ReLU
        ym = y * m_valid
        mu = jnp.sum(ym, axis=-1, keepdims=True) * inv_hw
        ex2 = jnp.sum(ym * y, axis=-1, keepdims=True) * inv_hw
        var = ex2 - mu * mu
        scale = g * jax.lax.rsqrt(var + eps)
        shift = b - mu * scale
        return jnp.maximum(y * scale + shift, 0.0)

    g1 = aff_ref[:, 0:1]
    b1 = aff_ref[:, 1:2]
    g2 = aff_ref[:, 2:3]
    b2 = aff_ref[:, 3:4]
    gl = aff_ref[:, 4:5]
    bl = aff_ref[:, 5:6]

    a1 = inorm_affine_relu(y1, g1, b1)                               # (C_out, L) f32

    # ---- in-VMEM ReflectionPad2d(1) of a1, flattened to (C_out, Hp*Wp) ----
    c_out = a1.shape[0]
    zl = jnp.zeros((c_out, Wp + 1), jnp.float32)
    zr = jnp.zeros((c_out, Wp - 1), jnp.float32)
    core = jnp.concatenate([zl, a1, zr], axis=-1)                    # interior @ rows 1..H, cols 1..W
    x2 = jnp.concatenate([core[:, 2 * Wp:3 * Wp],                    # top pad row    = a1 row 1
                          core[:, Wp:(H + 1) * Wp],                  # interior rows
                          core[:, (H - 1) * Wp:H * Wp]],             # bottom pad row = a1 row H-2
                         axis=-1)                                    # (C_out, Hp*Wp)
    # column reflection: col 0 <- col 2, col Wp-1 <- col Wp-3 (mask blend of wrap shifts)
    m_c0 = mask_ref[1:2, :]
    m_cl = mask_ref[2:3, :]
    n_flat = Hp * Wp
    sh_l = jnp.concatenate([x2[:, 2:], x2[:, :2]], axis=-1)                       # value at p+2
    sh_r = jnp.concatenate([x2[:, n_flat - 2:], x2[:, :n_flat - 2]], axis=-1)     # value at p-2
    x2 = x2 * (1.0 - m_c0 - m_cl) + sh_l * m_c0 + sh_r * m_cl
    # 2 zero columns of slack so the last tap slice stays in bounds
    x2 = jnp.concatenate([x2, jnp.zeros((c_out, 2), jnp.float32)], axis=-1)
    x2b = x2.astype(jnp.bfloat16)

    # ---- second 3x3 conv (same fused-taps single matmul) ----
    p2 = jnp.concatenate([x2b[:, o:o + L] for o in offs], axis=0)    # (9*C_out, L) bf16
    y2 = jnp.dot(w2_ref[...], p2, preferred_element_type=jnp.float32)
    a2 = inorm_affine_relu(y2, g2, b2)

    # ---- left branch: 1x1 conv is a matmul on the (already built) center tap ----
    yl = jnp.dot(wl_ref[...], taps1[4], preferred_element_type=jnp.float32)
    al = inorm_affine_relu(yl, gl, bl)

    # ---- residual add + AvgPool2d(3,2,pad=1,count_include_pad=True) as one matmul ----
    s = a2 + al                                                      # (C_out, L) f32
    out = jnp.dot(s, pool_ref[...], preferred_element_type=jnp.float32)  # (C_out, Ho*Wo)
    out_ref[0] = out.astype(out_ref.dtype)


def residual_block_forward(x, w_r1, w_r2, w_l,
                           gamma1, beta1, gamma2, beta2, gamma_l, beta_l,
                           *, eps=1e-5):
    """x: (N, C_in, H, W); w_r1: (C_out, C_in, 3, 3); w_r2: (C_out, C_out, 3, 3);
    w_l: (C_out, C_in, 1, 1); gamma*/beta*: (C_out,) InstanceNorm affine params."""
    n, c_in, h, w = x.shape
    c_out = w_r1.shape[0]
    hp, wp = h + 2, w + 2
    L = h * wp
    ho = (h - 1) // 2 + 1
    wo = (w - 1) // 2 + 1

    # spectrally-normalized weights, taps folded into the contraction dim, bf16 for MXU
    w1m = jnp.transpose(_spectral_normalize(w_r1), (0, 2, 3, 1)).reshape(c_out, 9 * c_in)
    w2m = jnp.transpose(_spectral_normalize(w_r2), (0, 2, 3, 1)).reshape(c_out, 9 * c_out)
    wlm = _spectral_normalize(w_l).reshape(c_out, c_in)
    w1m = w1m.astype(jnp.bfloat16)
    w2m = w2m.astype(jnp.bfloat16)
    wlm = wlm.astype(jnp.bfloat16)

    # reflection-padded input, flattened spatially (+2 slack cols), bf16
    x_pad = jnp.pad(x, ((0, 0), (0, 0), (1, 1), (1, 1)), mode="reflect")
    x_flat = x_pad.reshape(n, c_in, hp * wp)
    x_flat = jnp.pad(x_flat, ((0, 0), (0, 0), (0, 2))).astype(jnp.bfloat16)

    # per-channel InstanceNorm affine params packed on the lane axis
    aff = jnp.stack([gamma1, beta1, gamma2, beta2, gamma_l, beta_l], axis=1).astype(jnp.float32)

    # masks over the flattened padded lattice
    col = np.arange(hp * wp) % wp
    masks = jnp.asarray(np.stack([(col < w).astype(np.float32),
                                  (col == 0).astype(np.float32),
                                  (col == wp - 1).astype(np.float32)], axis=0))

    # AvgPool2d(3, 2, padding=1, count_include_pad=True) as an (L, Ho*Wo) matrix
    pool = np.zeros((L, ho * wo), np.float32)
    for oi in range(ho):
        for oj in range(wo):
            for di in (-1, 0, 1):
                for dj in (-1, 0, 1):
                    i, j = 2 * oi + di, 2 * oj + dj
                    if 0 <= i < h and 0 <= j < w:
                        pool[i * wp + j, oi * wo + oj] = 1.0 / 9.0
    pool = jnp.asarray(pool)

    kernel = functools.partial(_residual_block_kernel, H=h, W=w, eps=eps)
    # TODO(synk): for large H*W add a spatial-tile grid axis (cross-tile InstanceNorm
    # accumulator + conv halo exchange); one whole-image block per sample is fine here.
    out_flat = pl.pallas_call(
        kernel,
        out_shape=jax.ShapeDtypeStruct((n, c_out, ho * wo), jnp.float32),
        grid_spec=pltpu.PrefetchScalarGridSpec(
            num_scalar_prefetch=0,
            grid=(n,),
            in_specs=[
                pl.BlockSpec((1, c_in, hp * wp + 2), lambda b: (b, 0, 0)),
                pl.BlockSpec((c_out, 9 * c_in), lambda b: (0, 0)),
                pl.BlockSpec((c_out, 9 * c_out), lambda b: (0, 0)),
                pl.BlockSpec((c_out, c_in), lambda b: (0, 0)),
                pl.BlockSpec((c_out, 6), lambda b: (0, 0)),
                pl.BlockSpec((3, hp * wp), lambda b: (0, 0)),
                pl.BlockSpec((L, ho * wo), lambda b: (0, 0)),
            ],
            out_specs=pl.BlockSpec((1, c_out, ho * wo), lambda b: (b, 0, 0)),
        ),
        compiler_params=pltpu.CompilerParams(
            dimension_semantics=("parallel",)),
    )(x_flat, w1m, w2m, wlm, aff, masks, pool)

    return out_flat.reshape(n, c_out, ho, wo).astype(x.dtype)


def _reference_forward(x, w_r1, w_r2, w_l,
                       gamma1, beta1, gamma2, beta2, gamma_l, beta_l, eps=1e-5):
    """Pure-JAX reference (f32) for a correctness sanity check."""
    def conv(xx, ww):
        return jax.lax.conv_general_dilated(
            xx, ww, (1, 1), "VALID", dimension_numbers=("NCHW", "OIHW", "NCHW"))

    def inorm(y, g, b):
        mu = jnp.mean(y, axis=(2, 3), keepdims=True)
        var = jnp.mean((y - mu) ** 2, axis=(2, 3), keepdims=True)
        yn = (y - mu) * jax.lax.rsqrt(var + eps)
        return yn * g.reshape(1, -1, 1, 1) + b.reshape(1, -1, 1, 1)

    def avgpool(y):
        s = jax.lax.reduce_window(y, 0.0, jax.lax.add, (1, 1, 3, 3), (1, 1, 2, 2),
                                  ((0, 0), (0, 0), (1, 1), (1, 1)))
        return s / 9.0

    refl = lambda y: jnp.pad(y, ((0, 0), (0, 0), (1, 1), (1, 1)), mode="reflect")

    r = jax.nn.relu(inorm(conv(refl(x), _spectral_normalize(w_r1)), gamma1, beta1))
    r = jax.nn.relu(inorm(conv(refl(r), _spectral_normalize(w_r2)), gamma2, beta2))
    r = avgpool(r)
    l = jax.nn.relu(inorm(conv(x, _spectral_normalize(w_l)), gamma_l, beta_l))
    l = avgpool(l)
    return r + l


if __name__ == "__main__":
    key = jax.random.PRNGKey(0)
    N, C_IN, C_OUT, H, W = 2, 4, 4, 16, 16
    k1, k2, k3, k4 = jax.random.split(key, 4)

    x = jax.random.normal(k1, (N, C_IN, H, W), jnp.float32)

    def conv_init(k, shape):
        fan_in = shape[1] * shape[2] * shape[3]
        bound = 1.0 / (fan_in ** 0.5)
        return jax.random.uniform(k, shape, jnp.float32, -bound, bound)

    w_r1 = conv_init(k2, (C_OUT, C_IN, 3, 3))
    w_r2 = conv_init(k3, (C_OUT, C_OUT, 3, 3))
    w_l = conv_init(k4, (C_OUT, C_IN, 1, 1))

    # InstanceNorm2d(affine=True) default init: weight = 1, bias = 0
    g1 = jnp.ones((C_OUT,), jnp.float32)
    b1 = jnp.zeros((C_OUT,), jnp.float32)
    g2 = jnp.ones((C_OUT,), jnp.float32)
    b2 = jnp.zeros((C_OUT,), jnp.float32)
    gl = jnp.ones((C_OUT,), jnp.float32)
    bl = jnp.zeros((C_OUT,), jnp.float32)

    fwd = jax.jit(residual_block_forward)
    out = fwd(x, w_r1, w_r2, w_l, g1, b1, g2, b2, gl, bl)
    jax.block_until_ready(out)

    Ho = (H - 1) // 2 + 1
    Wo = (W - 1) // 2 + 1
    assert out.shape == (N, C_OUT, Ho, Wo), out.shape

    ref = jax.jit(_reference_forward)(x, w_r1, w_r2, w_l, g1, b1, g2, b2, gl, bl)
    max_err = float(jnp.max(jnp.abs(out - ref)))
    assert max_err < 0.15, f"kernel/reference mismatch: max abs err = {max_err}"

    print("KERNEL_OK")
</pallas_src>

<mosaic_0001>
module attributes {stable_mosaic.version = 11 : i64} {
  func.func @_residual_block_kernel(%arg0: i32, %arg1: memref<1x4x326xbf16, #tpu.memory_space<vmem>>, %arg2: memref<4x36xbf16, #tpu.memory_space<vmem>>, %arg3: memref<4x36xbf16, #tpu.memory_space<vmem>>, %arg4: memref<4x4xbf16, #tpu.memory_space<vmem>>, %arg5: memref<4x6xf32, #tpu.memory_space<vmem>>, %arg6: memref<3x324xf32, #tpu.memory_space<vmem>>, %arg7: memref<288x64xf32, #tpu.memory_space<vmem>>, %arg8: memref<1x4x64xf32, #tpu.memory_space<vmem>>) attributes {dimension_semantics = [#tpu.dimension_semantics<parallel>], iteration_bounds = array<i64: 2>, scalar_prefetch = 0 : i64, scratch_operands = 0 : i64, tpu.core_type = #tpu.core_type<tc>, window_params = [{transform_indices = @transform_0, window_bounds = array<i64: 1, 4, 326>}, {pipeline_mode = #tpu.pipeline_mode<synchronous>, transform_indices = @transform_1, window_bounds = array<i64: 4, 36>}, {pipeline_mode = #tpu.pipeline_mode<synchronous>, transform_indices = @transform_2, window_bounds = array<i64: 4, 36>}, {pipeline_mode = #tpu.pipeline_mode<synchronous>, transform_indices = @transform_3, window_bounds = array<i64: 4, 4>}, {pipeline_mode = #tpu.pipeline_mode<synchronous>, transform_indices = @transform_4, window_bounds = array<i64: 4, 6>}, {pipeline_mode = #tpu.pipeline_mode<synchronous>, transform_indices = @transform_5, window_bounds = array<i64: 3, 324>}, {pipeline_mode = #tpu.pipeline_mode<synchronous>, transform_indices = @transform_6, window_bounds = array<i64: 288, 64>}, {transform_indices = @transform_7, window_bounds = array<i64: 1, 4, 64>}]} {
    %c0 = arith.constant 0 : index
    %c0_0 = arith.constant 0 : index
    %c0_1 = arith.constant 0 : index
    %0 = vector.load %arg1[%c0, %c0_0, %c0_1] : memref<1x4x326xbf16, #tpu.memory_space<vmem>>, vector<1x4x326xbf16>
    %1 = vector.shape_cast %0 : vector<1x4x326xbf16> to vector<4x326xbf16>
    %2 = vector.extract_strided_slice %1 {offsets = [0, 0], sizes = [4, 288], strides = [1, 1]} : vector<4x326xbf16> to vector<4x288xbf16>
    %3 = vector.extract_strided_slice %1 {offsets = [0, 1], sizes = [4, 288], strides = [1, 1]} : vector<4x326xbf16> to vector<4x288xbf16>
    %4 = vector.extract_strided_slice %1 {offsets = [0, 2], sizes = [4, 288], strides = [1, 1]} : vector<4x326xbf16> to vector<4x288xbf16>
    %5 = vector.extract_strided_slice %1 {offsets = [0, 18], sizes = [4, 288], strides = [1, 1]} : vector<4x326xbf16> to vector<4x288xbf16>
    %6 = vector.extract_strided_slice %1 {offsets = [0, 19], sizes = [4, 288], strides = [1, 1]} : vector<4x326xbf16> to vector<4x288xbf16>
    %7 = vector.extract_strided_slice %1 {offsets = [0, 20], sizes = [4, 288], strides = [1, 1]} : vector<4x326xbf16> to vector<4x288xbf16>
    %8 = vector.extract_strided_slice %1 {offsets = [0, 36], sizes = [4, 288], strides = [1, 1]} : vector<4x326xbf16> to vector<4x288xbf16>
    %9 = vector.extract_strided_slice %1 {offsets = [0, 37], sizes = [4, 288], strides = [1, 1]} : vector<4x326xbf16> to vector<4x288xbf16>
    %10 = vector.extract_strided_slice %1 {offsets = [0, 38], sizes = [4, 288], strides = [1, 1]} : vector<4x326xbf16> to vector<4x288xbf16>
    %11 = tpu.concatenate %2, %3, %4, %5, %6, %7, %8, %9, %10 in 0 : vector<4x288xbf16>, vector<4x288xbf16>, vector<4x288xbf16>, vector<4x288xbf16>, vector<4x288xbf16>, vector<4x288xbf16>, vector<4x288xbf16>, vector<4x288xbf16>, vector<4x288xbf16> -> vector<36x288xbf16>
    %c0_2 = arith.constant 0 : index
    %c0_3 = arith.constant 0 : index
    %12 = vector.load %arg2[%c0_2, %c0_3] : memref<4x36xbf16, #tpu.memory_space<vmem>>, vector<4x36xbf16>
    %cst = arith.constant dense<0.000000e+00> : vector<4x288xf32>
    %13 = tpu.matmul %12, %11, %cst {dimension_numbers = #tpu.dot_dimension_numbers<[1], [0], [0], [1], [0, 0, 1, 1], [], []>} : vector<4x36xbf16>, vector<36x288xbf16>, vector<4x288xf32> -> vector<4x288xf32>
    %c0_4 = arith.constant 0 : index
    %c0_5 = arith.constant 0 : index
    %14 = vector.load %arg6[%c0_4, %c0_5] : memref<3x324xf32, #tpu.memory_space<vmem>>, vector<1x288xf32>
    %c0_6 = arith.constant 0 : index
    %c0_7 = arith.constant 0 : index
    %15 = vector.load %arg5[%c0_6, %c0_7] : memref<4x6xf32, #tpu.memory_space<vmem>>, vector<4x1xf32>
    %c0_8 = arith.constant 0 : index
    %c1 = arith.constant 1 : index
    %16 = vector.load %arg5[%c0_8, %c1] : memref<4x6xf32, #tpu.memory_space<vmem>>, vector<4x1xf32>
    %c0_9 = arith.constant 0 : index
    %c2 = arith.constant 2 : index
    %17 = vector.load %arg5[%c0_9, %c2] : memref<4x6xf32, #tpu.memory_space<vmem>>, vector<4x1xf32>
    %c0_10 = arith.constant 0 : index
    %c3 = arith.constant 3 : index
    %18 = vector.load %arg5[%c0_10, %c3] : memref<4x6xf32, #tpu.memory_space<vmem>>, vector<4x1xf32>
    %c0_11 = arith.constant 0 : index
    %c4 = arith.constant 4 : index
    %19 = vector.load %arg5[%c0_11, %c4] : memref<4x6xf32, #tpu.memory_space<vmem>>, vector<4x1xf32>
    %c0_12 = arith.constant 0 : index
    %c5 = arith.constant 5 : index
    %20 = vector.load %arg5[%c0_12, %c5] : memref<4x6xf32, #tpu.memory_space<vmem>>, vector<4x1xf32>
    %21 = vector.broadcast %14 : vector<1x288xf32> to vector<4x288xf32>
    %22 = arith.mulf %13, %21 : vector<4x288xf32>
    %cst_13 = arith.constant dense<0.000000e+00> : vector<4xf32>
    %23 = vector.multi_reduction <add>, %22, %cst_13 [1] : vector<4x288xf32> to vector<4xf32>
    %24 = vector.shape_cast %23 : vector<4xf32> to vector<4x1xf32>
    %cst_14 = arith.constant 3.906250e-03 : f32
    %25 = vector.broadcast %cst_14 : f32 to vector<4x1xf32>
    %26 = arith.mulf %24, %25 : vector<4x1xf32>
    %27 = arith.mulf %22, %13 : vector<4x288xf32>
    %cst_15 = arith.constant dense<0.000000e+00> : vector<4xf32>
    %28 = vector.multi_reduction <add>, %27, %cst_15 [1] : vector<4x288xf32> to vector<4xf32>
    %29 = vector.shape_cast %28 : vector<4xf32> to vector<4x1xf32>
    %cst_16 = arith.constant 3.906250e-03 : f32
    %30 = vector.broadcast %cst_16 : f32 to vector<4x1xf32>
    %31 = arith.mulf %29, %30 : vector<4x1xf32>
    %32 = arith.mulf %26, %26 : vector<4x1xf32>
    %33 = arith.subf %31, %32 : vector<4x1xf32>
    %cst_17 = arith.constant 9.99999974E-6 : f32
    %34 = vector.broadcast %cst_17 : f32 to vector<4x1xf32>
    %35 = arith.addf %33, %34 : vector<4x1xf32>
    %36 = math.rsqrt %35 : vector<4x1xf32>
    %37 = arith.mulf %15, %36 : vector<4x1xf32>
    %38 = arith.mulf %26, %37 : vector<4x1xf32>
    %39 = arith.subf %16, %38 : vector<4x1xf32>
    %40 = vector.broadcast %37 : vector<4x1xf32> to vector<4x288xf32>
    %41 = arith.mulf %13, %40 : vector<4x288xf32>
    %42 = vector.broadcast %39 : vector<4x1xf32> to vector<4x288xf32>
    %43 = arith.addf %41, %42 : vector<4x288xf32>
    %cst_18 = arith.constant 0.000000e+00 : f32
    %44 = vector.broadcast %cst_18 : f32 to vector<4x288xf32>
    %45 = arith.maximumf %43, %44 : vector<4x288xf32>
    %cst_19 = arith.constant 0.000000e+00 : f32
    %46 = vector.broadcast %cst_19 : f32 to vector<4x19xf32>
    %cst_20 = arith.constant 0.000000e+00 : f32
    %47 = vector.broadcast %cst_20 : f32 to vector<4x17xf32>
    %48 = tpu.concatenate %46, %45, %47 in 1 : vector<4x19xf32>, vector<4x288xf32>, vector<4x17xf32> -> vector<4x324xf32>
    %49 = vector.extract_strided_slice %48 {offsets = [0, 36], sizes = [4, 18], strides = [1, 1]} : vector<4x324xf32> to vector<4x18xf32>
    %50 = vector.extract_strided_slice %48 {offsets = [0, 18], sizes = [4, 288], strides = [1, 1]} : vector<4x324xf32> to vector<4x288xf32>
    %51 = vector.extract_strided_slice %48 {offsets = [0, 270], sizes = [4, 18], strides = [1, 1]} : vector<4x324xf32> to vector<4x18xf32>
    %52 = tpu.concatenate %49, %50, %51 in 1 : vector<4x18xf32>, vector<4x288xf32>, vector<4x18xf32> -> vector<4x324xf32>
    %c1_21 = arith.constant 1 : index
    %c0_22 = arith.constant 0 : index
    %53 = vector.load %arg6[%c1_21, %c0_22] : memref<3x324xf32, #tpu.memory_space<vmem>>, vector<1x324xf32>
    %c2_23 = arith.constant 2 : index
    %c0_24 = arith.constant 0 : index
    %54 = vector.load %arg6[%c2_23, %c0_24] : memref<3x324xf32, #tpu.memory_space<vmem>>, vector<1x324xf32>
    %55 = vector.extract_strided_slice %52 {offsets = [0, 2], sizes = [4, 322], strides = [1, 1]} : vector<4x324xf32> to vector<4x322xf32>
    %56 = vector.extract_strided_slice %52 {offsets = [0, 0], sizes = [4, 2], strides = [1, 1]} : vector<4x324xf32> to vector<4x2xf32>
    %57 = tpu.concatenate %55, %56 in 1 : vector<4x322xf32>, vector<4x2xf32> -> vector<4x324xf32>
    %58 = vector.extract_strided_slice %52 {offsets = [0, 322], sizes = [4, 2], strides = [1, 1]} : vector<4x324xf32> to vector<4x2xf32>
    %59 = vector.extract_strided_slice %52 {offsets = [0, 0], sizes = [4, 322], strides = [1, 1]} : vector<4x324xf32> to vector<4x322xf32>
    %60 = tpu.concatenate %58, %59 in 1 : vector<4x2xf32>, vector<4x322xf32> -> vector<4x324xf32>
    %cst_25 = arith.constant 1.000000e+00 : f32
    %61 = vector.broadcast %cst_25 : f32 to vector<1x324xf32>
    %62 = arith.subf %61, %53 : vector<1x324xf32>
    %63 = arith.subf %62, %54 : vector<1x324xf32>
    %64 = vector.broadcast %63 : vector<1x324xf32> to vector<4x324xf32>
    %65 = arith.mulf %52, %64 : vector<4x324xf32>
    %66 = vector.broadcast %53 : vector<1x324xf32> to vector<4x324xf32>
    %67 = arith.mulf %57, %66 : vector<4x324xf32>
    %68 = arith.addf %65, %67 : vector<4x324xf32>
    %69 = vector.broadcast %54 : vector<1x324xf32> to vector<4x324xf32>
    %70 = arith.mulf %60, %69 : vector<4x324xf32>
    %71 = arith.addf %68, %70 : vector<4x324xf32>
    %cst_26 = arith.constant 0.000000e+00 : f32
    %72 = vector.broadcast %cst_26 : f32 to vector<4x2xf32>
    %73 = tpu.concatenate %71, %72 in 1 : vector<4x324xf32>, vector<4x2xf32> -> vector<4x326xf32>
    %74 = arith.truncf %73 : vector<4x326xf32> to vector<4x326xbf16>
    %75 = vector.extract_strided_slice %74 {offsets = [0, 0], sizes = [4, 288], strides = [1, 1]} : vector<4x326xbf16> to vector<4x288xbf16>
    %76 = vector.extract_strided_slice %74 {offsets = [0, 1], sizes = [4, 288], strides = [1, 1]} : vector<4x326xbf16> to vector<4x288xbf16>
    %77 = vector.extract_strided_slice %74 {offsets = [0, 2], sizes = [4, 288], strides = [1, 1]} : vector<4x326xbf16> to vector<4x288xbf16>
    %78 = vector.extract_strided_slice %74 {offsets = [0, 18], sizes = [4, 288], strides = [1, 1]} : vector<4x326xbf16> to vector<4x288xbf16>
    %79 = vector.extract_strided_slice %74 {offsets = [0, 19], sizes = [4, 288], strides = [1, 1]} : vector<4x326xbf16> to vector<4x288xbf16>
    %80 = vector.extract_strided_slice %74 {offsets = [0, 20], sizes = [4, 288], strides = [1, 1]} : vector<4x326xbf16> to vector<4x288xbf16>
    %81 = vector.extract_strided_slice %74 {offsets = [0, 36], sizes = [4, 288], strides = [1, 1]} : vector<4x326xbf16> to vector<4x288xbf16>
    %82 = vector.extract_strided_slice %74 {offsets = [0, 37], sizes = [4, 288], strides = [1, 1]} : vector<4x326xbf16> to vector<4x288xbf16>
    %83 = vector.extract_strided_slice %74 {offsets = [0, 38], sizes = [4, 288], strides = [1, 1]} : vector<4x326xbf16> to vector<4x288xbf16>
    %84 = tpu.concatenate %75, %76, %77, %78, %79, %80, %81, %82, %83 in 0 : vector<4x288xbf16>, vector<4x288xbf16>, vector<4x288xbf16>, vector<4x288xbf16>, vector<4x288xbf16>, vector<4x288xbf16>, vector<4x288xbf16>, vector<4x288xbf16>, vector<4x288xbf16> -> vector<36x288xbf16>
    %c0_27 = arith.constant 0 : index
    %c0_28 = arith.constant 0 : index
    %85 = vector.load %arg3[%c0_27, %c0_28] : memref<4x36xbf16, #tpu.memory_space<vmem>>, vector<4x36xbf16>
    %cst_29 = arith.constant dense<0.000000e+00> : vector<4x288xf32>
    %86 = tpu.matmul %85, %84, %cst_29 {dimension_numbers = #tpu.dot_dimension_numbers<[1], [0], [0], [1], [0, 0, 1, 1], [], []>} : vector<4x36xbf16>, vector<36x288xbf16>, vector<4x288xf32> -> vector<4x288xf32>
    %87 = vector.broadcast %14 : vector<1x288xf32> to vector<4x288xf32>
    %88 = arith.mulf %86, %87 : vector<4x288xf32>
    %cst_30 = arith.constant dense<0.000000e+00> : vector<4xf32>
    %89 = vector.multi_reduction <add>, %88, %cst_30 [1] : vector<4x288xf32> to vector<4xf32>
    %90 = vector.shape_cast %89 : vector<4xf32> to vector<4x1xf32>
    %cst_31 = arith.constant 3.906250e-03 : f32
    %91 = vector.broadcast %cst_31 : f32 to vector<4x1xf32>
    %92 = arith.mulf %90, %91 : vector<4x1xf32>
    %93 = arith.mulf %88, %86 : vector<4x288xf32>
    %cst_32 = arith.constant dense<0.000000e+00> : vector<4xf32>
    %94 = vector.multi_reduction <add>, %93, %cst_32 [1] : vector<4x288xf32> to vector<4xf32>
    %95 = vector.shape_cast %94 : vector<4xf32> to vector<4x1xf32>
    %cst_33 = arith.constant 3.906250e-03 : f32
    %96 = vector.broadcast %cst_33 : f32 to vector<4x1xf32>
    %97 = arith.mulf %95, %96 : vector<4x1xf32>
    %98 = arith.mulf %92, %92 : vector<4x1xf32>
    %99 = arith.subf %97, %98 : vector<4x1xf32>
    %cst_34 = arith.constant 9.99999974E-6 : f32
    %100 = vector.broadcast %cst_34 : f32 to vector<4x1xf32>
    %101 = arith.addf %99, %100 : vector<4x1xf32>
    %102 = math.rsqrt %101 : vector<4x1xf32>
    %103 = arith.mulf %17, %102 : vector<4x1xf32>
    %104 = arith.mulf %92, %103 : vector<4x1xf32>
    %105 = arith.subf %18, %104 : vector<4x1xf32>
    %106 = vector.broadcast %103 : vector<4x1xf32> to vector<4x288xf32>
    %107 = arith.mulf %86, %106 : vector<4x288xf32>
    %108 = vector.broadcast %105 : vector<4x1xf32> to vector<4x288xf32>
    %109 = arith.addf %107, %108 : vector<4x288xf32>
    %cst_35 = arith.constant 0.000000e+00 : f32
    %110 = vector.broadcast %cst_35 : f32 to vector<4x288xf32>
    %111 = arith.maximumf %109, %110 : vector<4x288xf32>
    %c0_36 = arith.constant 0 : index
    %c0_37 = arith.constant 0 : index
    %112 = vector.load %arg4[%c0_36, %c0_37] : memref<4x4xbf16, #tpu.memory_space<vmem>>, vector<4x4xbf16>
    %cst_38 = arith.constant dense<0.000000e+00> : vector<4x288xf32>
    %113 = tpu.matmul %112, %6, %cst_38 {dimension_numbers = #tpu.dot_dimension_numbers<[1], [0], [0], [1], [0, 0, 1, 1], [], []>} : vector<4x4xbf16>, vector<4x288xbf16>, vector<4x288xf32> -> vector<4x288xf32>
    %114 = vector.broadcast %14 : vector<1x288xf32> to vector<4x288xf32>
    %115 = arith.mulf %113, %114 : vector<4x288xf32>
    %cst_39 = arith.constant dense<0.000000e+00> : vector<4xf32>
    %116 = vector.multi_reduction <add>, %115, %cst_39 [1] : vector<4x288xf32> to vector<4xf32>
    %117 = vector.shape_cast %116 : vector<4xf32> to vector<4x1xf32>
    %cst_40 = arith.constant 3.906250e-03 : f32
    %118 = vector.broadcast %cst_40 : f32 to vector<4x1xf32>
    %119 = arith.mulf %117, %118 : vector<4x1xf32>
    %120 = arith.mulf %115, %113 : vector<4x288xf32>
    %cst_41 = arith.constant dense<0.000000e+00> : vector<4xf32>
    %121 = vector.multi_reduction <add>, %120, %cst_41 [1] : vector<4x288xf32> to vector<4xf32>
    %122 = vector.shape_cast %121 : vector<4xf32> to vector<4x1xf32>
    %cst_42 = arith.constant 3.906250e-03 : f32
    %123 = vector.broadcast %cst_42 : f32 to vector<4x1xf32>
    %124 = arith.mulf %122, %123 : vector<4x1xf32>
    %125 = arith.mulf %119, %119 : vector<4x1xf32>
    %126 = arith.subf %124, %125 : vector<4x1xf32>
    %cst_43 = arith.constant 9.99999974E-6 : f32
    %127 = vector.broadcast %cst_43 : f32 to vector<4x1xf32>
    %128 = arith.addf %126, %127 : vector<4x1xf32>
    %129 = math.rsqrt %128 : vector<4x1xf32>
    %130 = arith.mulf %19, %129 : vector<4x1xf32>
    %131 = arith.mulf %119, %130 : vector<4x1xf32>
    %132 = arith.subf %20, %131 : vector<4x1xf32>
    %133 = vector.broadcast %130 : vector<4x1xf32> to vector<4x288xf32>
    %134 = arith.mulf %113, %133 : vector<4x288xf32>
    %135 = vector.broadcast %132 : vector<4x1xf32> to vector<4x288xf32>
    %136 = arith.addf %134, %135 : vector<4x288xf32>
    %cst_44 = arith.constant 0.000000e+00 : f32
    %137 = vector.broadcast %cst_44 : f32 to vector<4x288xf32>
    %138 = arith.maximumf %136, %137 : vector<4x288xf32>
    %139 = arith.addf %111, %138 : vector<4x288xf32>
    %c0_45 = arith.constant 0 : index
    %c0_46 = arith.constant 0 : index
    %140 = vector.load %arg7[%c0_45, %c0_46] : memref<288x64xf32, #tpu.memory_space<vmem>>, vector<288x64xf32>
    %cst_47 = arith.constant dense<0.000000e+00> : vector<4x64xf32>
    %141 = tpu.matmul %139, %140, %cst_47 {dimension_numbers = #tpu.dot_dimension_numbers<[1], [0], [0], [1], [0, 0, 1, 1], [], []>} : vector<4x288xf32>, vector<288x64xf32>, vector<4x64xf32> -> vector<4x64xf32>
    %c0_48 = arith.constant 0 : index
    %c0_49 = arith.constant 0 : index
    %c0_50 = arith.constant 0 : index
    %142 = vector.load %arg8[%c0_48, %c0_49, %c0_50] : memref<1x4x64xf32, #tpu.memory_space<vmem>>, vector<1x4x64xf32>
    %143 = vector.shape_cast %142 : vector<1x4x64xf32> to vector<4x64xf32>
    %144 = vector.shape_cast %141 : vector<4x64xf32> to vector<1x4x64xf32>
    tpu.vector_store %arg8[%c0_48, %c0_49, %c0_50], %144 {strides = array<i32>} : memref<1x4x64xf32, #tpu.memory_space<vmem>>, vector<1x4x64xf32>,
    return
  }
  func.func @transform_0(%arg0: i32) -> (i32, i32, i32) {
    %c0_i32 = arith.constant 0 : i32
    %c0_i32_0 = arith.constant 0 : i32
    %c0_i32_1 = arith.constant 0 : i32
    return %arg0, %c0_i32, %c0_i32_0 : i32, i32, i32
  }
  func.func @transform_1(%arg0: i32) -> (i32, i32) {
    %c0_i32 = arith.constant 0 : i32
    %c0_i32_0 = arith.constant 0 : i32
    %c0_i32_1 = arith.constant 0 : i32
    return %c0_i32, %c0_i32_0 : i32, i32
  }
  func.func @transform_2(%arg0: i32) -> (i32, i32) {
    %c0_i32 = arith.constant 0 : i32
    %c0_i32_0 = arith.constant 0 : i32
    %c0_i32_1 = arith.constant 0 : i32
    return %c0_i32, %c0_i32_0 : i32, i32
  }
  func.func @transform_3(%arg0: i32) -> (i32, i32) {
    %c0_i32 = arith.constant 0 : i32
    %c0_i32_0 = arith.constant 0 : i32
    %c0_i32_1 = arith.constant 0 : i32
    return %c0_i32, %c0_i32_0 : i32, i32
  }
  func.func @transform_4(%arg0: i32) -> (i32, i32) {
    %c0_i32 = arith.constant 0 : i32
    %c0_i32_0 = arith.constant 0 : i32
    %c0_i32_1 = arith.constant 0 : i32
    return %c0_i32, %c0_i32_0 : i32, i32
  }
  func.func @transform_5(%arg0: i32) -> (i32, i32) {
    %c0_i32 = arith.constant 0 : i32
    %c0_i32_0 = arith.constant 0 : i32
    %c0_i32_1 = arith.constant 0 : i32
    return %c0_i32, %c0_i32_0 : i32, i32
  }
  func.func @transform_6(%arg0: i32) -> (i32, i32) {
    %c0_i32 = arith.constant 0 : i32
    %c0_i32_0 = arith.constant 0 : i32
    %c0_i32_1 = arith.constant 0 : i32
    return %c0_i32, %c0_i32_0 : i32, i32
  }
  func.func @transform_7(%arg0: i32) -> (i32, i32, i32) {
    %c0_i32 = arith.constant 0 : i32
    %c0_i32_0 = arith.constant 0 : i32
    %c0_i32_1 = arith.constant 0 : i32
    return %arg0, %c0_i32, %c0_i32_0 : i32, i32, i32
  }
}

</mosaic_0001>

<llo_original>
// kernel: custom-call
$region0: #{custom-call}
  %s0 = inlined_call_operand.vmem [shape: f32[4], index: 0, kind: output, shape index: {}]

// kernel: residual_block_forward.1
$region0: #{residual_block_forward.1}
  #allocation0 [shape = 'u32[]', space=smem, size = 0x4, offset = 0x4, fixed_abs, tag = 'smem constant byte address 0x4 - core index']
  #allocation1 [shape = 'u32[144,128]{1,0:T(1,128)}', space=vmem, size = 0x12000, scoped, tag = 'internal scratch']
  %s0 = inlined_call_operand.vmem [shape: bf16[2,4,326], index: 0, kind: input, shape index: {}]
  %s1 = inlined_call_operand.vmem [shape: bf16[4,36], index: 1, kind: input, shape index: {}]
  %s2 = inlined_call_operand.vmem [shape: bf16[4,36], index: 2, kind: input, shape index: {}]
  %s3 = inlined_call_operand.vmem [shape: bf16[4,4], index: 3, kind: input, shape index: {}]
  %s4 = inlined_call_operand.vmem [shape: f32[4,6], index: 4, kind: input, shape index: {}]
  %s5 = inlined_call_operand.vmem [shape: f32[3,324], index: 5, kind: input, shape index: {}]
  %s6 = inlined_call_operand.vmem [shape: f32[288,64], index: 6, kind: input, shape index: {}]
  %s7 = inlined_call_operand.vmem [shape: f32[2,4,64], index: 7, kind: output, shape index: {}]
  %s8 = sld [smem:[#allocation0]]
  $region61: #{residual_block_forward.1} parent=0
    _
  %s10 = ssub.s32 1, %s8
  %s11 = scalar_select 0, %s10, %s8
  loop: start=0, step=1, limit=4
  $region2: #{residual_block_forward.1} parent=0 // loop_pre_header
    _
  $region3: #{residual_block_forward.1} parent=0 // loop_header
    %s13 = sphi 0, %s17
    %p14 = scmp.ge.s32.totalorder %s13, 4
    %s23 = sphi 0, %s25
    %s26 = sphi 0, %s23
    %s27 = sphi 0, %s26
    %s43 = sphi 0, %s27
    %s47 = sphi 0, %s47
    %s49 = sphi 0, %s47
    %s50 = sphi 0, %s49
    %s64 = sphi 0, %s50
    %s68 = sphi 0, %s68
    %s70 = sphi 0, %s68
    %s71 = sphi 0, %s70
    %s85 = sphi 0, %s71
    %s89 = sphi 0, %s89
    %s91 = sphi 0, %s89
    %s92 = sphi 0, %s91
    %s106 = sphi 0, %s92
    %s110 = sphi 0, %s110
    %s112 = sphi 0, %s110
    %s113 = sphi 0, %s112
    %s127 = sphi 0, %s113
    %s131 = sphi 0, %s131
    %s133 = sphi 0, %s131
    %s134 = sphi 0, %s133
    %s148 = sphi 0, %s134
    %s152 = sphi 0, %s152
    %s154 = sphi 0, %s152
    %s155 = sphi 0, %s154
    %s169 = sphi 0, %s155
    %s175 = sphi 0, %s177
    %s178 = sphi 0, %s175
    %s179 = sphi 0, %s178
    %s195 = sphi 0, %s179
  $region4: #{residual_block_forward.1} parent=0 // loop_header_branch
    %16 = sbr.rel (%p14) target = $region8
  $region5: #{residual_block_forward.1} parent=0 // loop_body
    %s18 = ssub.s32 %s13, 1
    %s19 = ssub.s32 %s13, 2
    %s20 = sadd.s32 %s13, 1
    %s21 = ssub.s32 %s13, %s20
    %p22 = scmp.eq.s32.totalorder %s21, 0
    %s24 = sadd.s32 %s23, 1
    %s25 = scalar_select %p22, %s23, %s24
    %p28 = pneg %p22
    %p29 = scmp.eq.s32.totalorder %s13, 1
    %p30 = por %p28, %p29
    %p31 = scmp.ne.s32.totalorder %s23, %s26
    %p32 = scmp.eq.s32.totalorder %s13, 0
    %p33 = por %p31, %p32
    %p34 = scmp.ne.s32.totalorder %s23, %s26
    %p35 = scmp.eq.s32.totalorder %s18, 1
    %p36 = por %p34, %p35
    %p37 = scmp.ne.s32.totalorder %s26, %s27
    %p38 = scmp.eq.s32.totalorder %s18, 0
    %p39 = por %p37, %p38
    %p40 = scmp.ne.s32.totalorder %s26, %s27
    %p41 = scmp.eq.s32.totalorder %s19, 1
    %p42 = por %p40, %p41
    %p44 = scmp.ne.s32.totalorder %s27, %s43
    %p45 = scmp.eq.s32.totalorder %s19, 0
    %p46 = por %p44, %p45
    %s48 = sadd.s32 %s47, 1
    %p51 = scmp.eq.s32.totalorder %s13, 1
    %p52 = scmp.ne.s32.totalorder %s47, %s49
    %p53 = scmp.eq.s32.totalorder %s13, 0
    %p54 = por %p52, %p53
    %p55 = scmp.ne.s32.totalorder %s47, %s49
    %p56 = scmp.eq.s32.totalorder %s18, 1
    %p57 = por %p55, %p56
    %p58 = scmp.ne.s32.totalorder %s49, %s50
    %p59 = scmp.eq.s32.totalorder %s18, 0
    %p60 = por %p58, %p59
    %p61 = scmp.ne.s32.totalorder %s49, %s50
    %p62 = scmp.eq.s32.totalorder %s19, 1
    %p63 = por %p61, %p62
    %p65 = scmp.ne.s32.totalorder %s50, %s64
    %p66 = scmp.eq.s32.totalorder %s19, 0
    %p67 = por %p65, %p66
    %s69 = sadd.s32 %s68, 1
    %p72 = scmp.eq.s32.totalorder %s13, 1
    %p73 = scmp.ne.s32.totalorder %s68, %s70
    %p74 = scmp.eq.s32.totalorder %s13, 0
    %p75 = por %p73, %p74
    %p76 = scmp.ne.s32.totalorder %s68, %s70
    %p77 = scmp.eq.s32.totalorder %s18, 1
    %p78 = por %p76, %p77
    %p79 = scmp.ne.s32.totalorder %s70, %s71
    %p80 = scmp.eq.s32.totalorder %s18, 0
    %p81 = por %p79, %p80
    %p82 = scmp.ne.s32.totalorder %s70, %s71
    %p83 = scmp.eq.s32.totalorder %s19, 1
    %p84 = por %p82, %p83
    %p86 = scmp.ne.s32.totalorder %s71, %s85
    %p87 = scmp.eq.s32.totalorder %s19, 0
    %p88 = por %p86, %p87
    %s90 = sadd.s32 %s89, 1
    %p93 = scmp.eq.s32.totalorder %s13, 1
    %p94 = scmp.ne.s32.totalorder %s89, %s91
    %p95 = scmp.eq.s32.totalorder %s13, 0
    %p96 = por %p94, %p95
    %p97 = scmp.ne.s32.totalorder %s89, %s91
    %p98 = scmp.eq.s32.totalorder %s18, 1
    %p99 = por %p97, %p98
    %p100 = scmp.ne.s32.totalorder %s91, %s92
    %p101 = scmp.eq.s32.totalorder %s18, 0
    %p102 = por %p100, %p101
    %p103 = scmp.ne.s32.totalorder %s91, %s92
    %p104 = scmp.eq.s32.totalorder %s19, 1
    %p105 = por %p103, %p104
    %p107 = scmp.ne.s32.totalorder %s92, %s106
    %p108 = scmp.eq.s32.totalorder %s19, 0
    %p109 = por %p107, %p108
    %s111 = sadd.s32 %s110, 1
    %p114 = scmp.eq.s32.totalorder %s13, 1
    %p115 = scmp.ne.s32.totalorder %s110, %s112
    %p116 = scmp.eq.s32.totalorder %s13, 0
    %p117 = por %p115, %p116
    %p118 = scmp.ne.s32.totalorder %s110, %s112
    %p119 = scmp.eq.s32.totalorder %s18, 1
    %p120 = por %p118, %p119
    %p121 = scmp.ne.s32.totalorder %s112, %s113
    %p122 = scmp.eq.s32.totalorder %s18, 0
    %p123 = por %p121, %p122
    %p124 = scmp.ne.s32.totalorder %s112, %s113
    %p125 = scmp.eq.s32.totalorder %s19, 1
    %p126 = por %p124, %p125
    %p128 = scmp.ne.s32.totalorder %s113, %s127
    %p129 = scmp.eq.s32.totalorder %s19, 0
    %p130 = por %p128, %p129
    %s132 = sadd.s32 %s131, 1
    %p135 = scmp.eq.s32.totalorder %s13, 1
    %p136 = scmp.ne.s32.totalorder %s131, %s133
    %p137 = scmp.eq.s32.totalorder %s13, 0
    %p138 = por %p136, %p137
    %p139 = scmp.ne.s32.totalorder %s131, %s133
    %p140 = scmp.eq.s32.totalorder %s18, 1
    %p141 = por %p139, %p140
    %p142 = scmp.ne.s32.totalorder %s133, %s134
    %p143 = scmp.eq.s32.totalorder %s18, 0
    %p144 = por %p142, %p143
    %p145 = scmp.ne.s32.totalorder %s133, %s134
    %p146 = scmp.eq.s32.totalorder %s19, 1
    %p147 = por %p145, %p146
    %p149 = scmp.ne.s32.totalorder %s134, %s148
    %p150 = scmp.eq.s32.totalorder %s19, 0
    %p151 = por %p149, %p150
    %s153 = sadd.s32 %s152, 1
    %p156 = scmp.eq.s32.totalorder %s13, 1
    %p157 = scmp.ne.s32.totalorder %s152, %s154
    %p158 = scmp.eq.s32.totalorder %s13, 0
    %p159 = por %p157, %p158
    %p160 = scmp.ne.s32.totalorder %s152, %s154
    %p161 = scmp.eq.s32.totalorder %s18, 1
    %p162 = por %p160, %p161
    %p163 = scmp.ne.s32.totalorder %s154, %s155
    %p164 = scmp.eq.s32.totalorder %s18, 0
    %p165 = por %p163, %p164
    %p166 = scmp.ne.s32.totalorder %s154, %s155
    %p167 = scmp.eq.s32.totalorder %s19, 1
    %p168 = por %p166, %p167
    %p170 = scmp.ne.s32.totalorder %s155, %s169
    %p171 = scmp.eq.s32.totalorder %s19, 0
    %p172 = por %p170, %p171
    %s173 = ssub.s32 %s13, %s20
    %p174 = scmp.eq.s32.totalorder %s173, 0
    %s176 = sadd.s32 %s175, 1
    %s177 = scalar_select %p174, %s175, %s176
    %p180 = pneg %p174
    %p181 = scmp.eq.s32.totalorder %s13, 1
    %p182 = por %p180, %p181
    %p183 = scmp.ne.s32.totalorder %s175, %s178
    %p184 = scmp.eq.s32.totalorder %s13, 0
    %p185 = por %p183, %p184
    %p186 = scmp.ne.s32.totalorder %s175, %s178
    %p187 = scmp.eq.s32.totalorder %s18, 1
    %p188 = por %p186, %p187
    %p189 = scmp.ne.s32.totalorder %s178, %s179
    %p190 = scmp.eq.s32.totalorder %s18, 0
    %p191 = por %p189, %p190
    %p192 = scmp.ne.s32.totalorder %s178, %s179
    %p193 = scmp.eq.s32.totalorder %s19, 1
    %p194 = por %p192, %p193
    %p196 = scmp.ne.s32.totalorder %s179, %s195
    %p197 = scmp.eq.s32.totalorder %s19, 0
    %p198 = por %p196, %p197
    %p199 = scmp.le.s32.totalorder 1, %s13
    %p200 = scmp.lt.s32.totalorder %s13, 3
    %p201 = pnand %p199, %p200
    %p202 = pneg %p201
    // Predicated region
    $region9: #{residual_block_forward.1} parent=5 // pred_check
      _
    $region10: #{residual_block_forward.1} parent=5 // pred_check_branch
      %204 = sbr.rel (%p201) target = $region12
    $region11: #{residual_block_forward.1} parent=5 // pred_region
      %s205 = ssub.s32 %s13, 1
      // Predicated region
      $region13: #{residual_block_forward.1} parent=11 // pred_check
        %p206 = pneg %p60
      $region14: #{residual_block_forward.1} parent=11 // pred_check_branch
        %208 = sbr.rel (%p206) target = $region16
      $region15: #{residual_block_forward.1} parent=11 // pred_region
        _
      $region16: #{residual_block_forward.1} parent=11 // pred_fallthru
        _
      // Predicated region
      $region17: #{residual_block_forward.1} parent=11 // pred_check
        %p209 = pneg %p81
      $region18: #{residual_block_forward.1} parent=11 // pred_check_branch
        %211 = sbr.rel (%p209) target = $region20
      $region19: #{residual_block_forward.1} parent=11 // pred_region
        _
      $region20: #{residual_block_forward.1} parent=11 // pred_fallthru
        _
      // Predicated region
      $region21: #{residual_block_forward.1} parent=11 // pred_check
        %p212 = pneg %p102
      $region22: #{residual_block_forward.1} parent=11 // pred_check_branch
        %214 = sbr.rel (%p212) target = $region24
      $region23: #{residual_block_forward.1} parent=11 // pred_region
        _
      $region24: #{residual_block_forward.1} parent=11 // pred_fallthru
        _
      // Predicated region
      $region25: #{residual_block_forward.1} parent=11 // pred_check
        %p215 = pneg %p123
      $region26: #{residual_block_forward.1} parent=11 // pred_check_branch
        %217 = sbr.rel (%p215) target = $region28
      $region27: #{residual_block_forward.1} parent=11 // pred_region
        _
      $region28: #{residual_block_forward.1} parent=11 // pred_fallthru
        _
      // Predicated region
      $region29: #{residual_block_forward.1} parent=11 // pred_check
        %p218 = pneg %p144
      $region30: #{residual_block_forward.1} parent=11 // pred_check_branch
        %220 = sbr.rel (%p218) target = $region32
      $region31: #{residual_block_forward.1} parent=11 // pred_region
        _
      $region32: #{residual_block_forward.1} parent=11 // pred_fallthru
        _
      // Predicated region
      $region33: #{residual_block_forward.1} parent=11 // pred_check
        %p221 = pneg %p165
      $region34: #{residual_block_forward.1} parent=11 // pred_check_branch
        %223 = sbr.rel (%p221) target = $region36
      $region35: #{residual_block_forward.1} parent=11 // pred_region
        _
      $region36: #{residual_block_forward.1} parent=11 // pred_fallthru
        _
    $region12: #{residual_block_forward.1} parent=5 // pred_fallthru
      _
    %p224 = scmp.lt.s32.totalorder %s13, 2
    // Predicated region
    $region37: #{residual_block_forward.1} parent=5 // pred_check
      %p225 = pneg %p224
    $region38: #{residual_block_forward.1} parent=5 // pred_check_branch
      %227 = sbr.rel (%p225) target = $region40
    $region39: #{residual_block_forward.1} parent=5 // pred_region
      // Predicated region
      $region41: #{residual_block_forward.1} parent=39 // pred_check
        %p228 = pneg %p33
      $region42: #{residual_block_forward.1} parent=39 // pred_check_branch
        %230 = sbr.rel (%p228) target = $region44
      $region43: #{residual_block_forward.1} parent=39 // pred_region
        %p231 = scmp.lt.s32.totalorder %s13, 1
        %s232 = scalar_select %p231, %s13, 1
        %s233 = smul.addr %s232, 3
        %s234 = smul.addr %s233, 2
        %s235 = scalar_lea.vmem %s0, %s234
      $region44: #{residual_block_forward.1} parent=39 // pred_fallthru
        _
    $region40: #{residual_block_forward.1} parent=5 // pred_fallthru
      _
    %p236 = scmp.le.s32.totalorder 1, %s13
    %p237 = scmp.lt.s32.totalorder %s13, 3
    %p238 = pnand %p236, %p237
    %p239 = pneg %p238
    // Predicated region
    $region45: #{residual_block_forward.1} parent=5 // pred_check
      _
    $region46: #{residual_block_forward.1} parent=5 // pred_check_branch
      %241 = sbr.rel (%p238) target = $region48
    $region47: #{residual_block_forward.1} parent=5 // pred_region
      %s242 = ssub.s32 %s13, 1
      %p243 = scmp.lt.s32.totalorder %s18, 1
      %s244 = scalar_select %p243, %s18, 1
      %s245 = smul.addr %s244, 3
      %s246 = smul.addr %s245, 2
      %s247 = scalar_lea.vmem %s0, %s246
      %p248 = pneg %p39
      %p249 = pneg %p36
      %p250 = pneg %p60
      %p251 = pneg %p57
      %p252 = pneg %p81
      %p253 = pneg %p78
      %p254 = pneg %p102
      %p255 = pneg %p99
      %p256 = pneg %p123
      %p257 = pneg %p120
      %p258 = pneg %p144
      %p259 = pneg %p141
      %p260 = pneg %p165
      %p261 = pneg %p162
      %p262 = pneg %p191
      %p263 = pneg %p188
      %p264 = scmp.lt.s32.totalorder %s18, 1
      %s265 = scalar_select %p264, %s18, 1
      %s266 = smul.addr %s265, 4
      %s267 = scalar_lea.vmem %s7, %s266
      %p268 = scmp.lt.s32.totalorder %s18, 1
      %s269 = scalar_select %p268, %s18, 1
      %s270 = smul.addr %s269, 3
      %s271 = smul.addr %s270, 2
      %s272 = scalar_lea.vmem %s0, %s271
      %p273 = scmp.lt.s32.totalorder %s18, 1
      %s274 = scalar_select %p273, %s18, 1
      %s275 = smul.addr %s274, 4
      %s276 = scalar_lea.vmem %s7, %s275
      %v278 = vld [vmem:[%s272] sm:$0x3f]
      %v280 = vcombine.high %v278, %v278
      %v282 = vunpack.c.l.s4 1983009808
      %v283 = vunpack.c.0.s8 %v282
      %v284 = vlaneseq
      %v285 = vshrl.u32 %v284, 7
      %v286 = vsub.s32 %v283, %v285
      %v287 = vrot.slane %v278, %v286
      %v289 = vunpack.c.l.s4 1983009808
      %v290 = vunpack.c.0.s8 %v289
      %v291 = vlaneseq
      %v292 = vshrl.u32 %v291, 7
      %v293 = vsub.s32 %v290, %v292
      %v294 = vrot.slane %v280, %v293
      %v295 = vcombine.high %v287, %v287
      %v296 = vcombine.low %v278, %v278
      %v298 = vunpack.c.l.s4 1983009808
      %v299 = vunpack.c.0.s8 %v298
      %v300 = vlaneseq
      %v301 = vshrl.u32 %v300, 7
      %v302 = vsub.s32 %v299, %v301
      %v303 = vrot.slane %v296, %v302
      %v304 = vcombine.high %v303, %v303
      %305 = vrot.lane.b32.xlu0 %v303, 127
      %v306 = vpop.permute.xlu0 %305
      %307 = vrot.lane.b32.xlu0 %v304, 127
      %v308 = vpop.permute.xlu0 %307
      %309 = vrot.lane.b32.xlu0 %v287, 127
      %v310 = vpop.permute.xlu0 %309
      %vm311 = vcmask 1039360
      %v312 = vsel %vm311, %v306, %v308
      %v313 = vsel %vm311, %v308, %v310
      %v314 = vcombine.low %v287, %v287
      %v315 = vcombine.low %v294, %v294
      %316 = vrot.lane.b32.xlu0 %v314, 126
      %v317 = vpop.permute.xlu0 %316
      %318 = vrot.lane.b32.xlu0 %v287, 126
      %v319 = vpop.permute.xlu0 %318
      %320 = vrot.lane.b32.xlu0 %v315, 126
      %v321 = vpop.permute.xlu0 %320
      %vm322 = vcmask 1031168
      %v323 = vsel %vm322, %v317, %v319
      %v324 = vsel %vm322, %v319, %v321
      %v325 = vcombine.low %v303, %v303
      %326 = vrot.lane.b32.xlu0 %v325, 110
      %v327 = vpop.permute.xlu0 %326
      %328 = vrot.lane.b32.xlu0 %v303, 110
      %v329 = vpop.permute.xlu0 %328
      %330 = vrot.lane.b32.xlu0 %v314, 110
      %v331 = vpop.permute.xlu0 %330
      %vm332 = vcmask 900096
      %v333 = vsel %vm332, %v327, %v329
      %v334 = vsel %vm332, %v329, %v331
      %335 = vrot.lane.b32.xlu0 %v287, 109
      %v336 = vpop.permute.xlu0 %335
      %337 = vrot.lane.b32.xlu0 %v295, 109
      %v338 = vpop.permute.xlu0 %337
      %339 = vrot.lane.b32.xlu0 %v294, 109
      %v340 = vpop.permute.xlu0 %339
      %vm341 = vcmask 891904
      %v342 = vsel %vm341, %v336, %v338
      %v343 = vsel %vm341, %v338, %v340
      %344 = vrot.lane.b32.xlu0 %v303, 108
      %v345 = vpop.permute.xlu0 %344
      %346 = vrot.lane.b32.xlu0 %v304, 108
      %v347 = vpop.permute.xlu0 %346
      %348 = vrot.lane.b32.xlu0 %v287, 108
      %v349 = vpop.permute.xlu0 %348
      %vm350 = vcmask 883712
      %v351 = vsel %vm350, %v345, %v347
      %v352 = vsel %vm350, %v347, %v349
      %353 = vrot.lane.b32.xlu0 %v314, 92
      %v354 = vpop.permute.xlu0 %353
      %355 = vrot.lane.b32.xlu0 %v287, 92
      %v356 = vpop.permute.xlu0 %355
      %357 = vrot.lane.b32.xlu0 %v315, 92
      %v358 = vpop.permute.xlu0 %357
      %vm359 = vcmask 752640
      %v360 = vsel %vm359, %v354, %v356
      %v361 = vsel %vm359, %v356, %v358
      %362 = vrot.lane.b32.xlu0 %v325, 91
      %v363 = vpop.permute.xlu0 %362
      %364 = vrot.lane.b32.xlu0 %v303, 91
      %v365 = vpop.permute.xlu0 %364
      %366 = vrot.lane.b32.xlu0 %v314, 91
      %v367 = vpop.permute.xlu0 %366
      %vm368 = vcmask 744448
      %v369 = vsel %vm368, %v363, %v365
      %v370 = vsel %vm368, %v365, %v367
      %371 = vrot.lane.b32.xlu0 %v287, 90
      %v372 = vpop.permute.xlu0 %371
      %373 = vrot.lane.b32.xlu0 %v295, 90
      %v374 = vpop.permute.xlu0 %373
      %375 = vrot.lane.b32.xlu0 %v294, 90
      %v376 = vpop.permute.xlu0 %375
      %vm377 = vcmask 736256
      %v378 = vsel %vm377, %v372, %v374
      %v379 = vsel %vm377, %v374, %v376
      %vm380 = vcmask 1041408
      %v383 = vsel %vm380, %v287, %v312
      %v386 = vsel %vm380, %v295, %v313
      %v389 = vsel %vm380, %v294, %v310
      %vm390 = vcmask 1043456
      %v392 = vsel %vm390, %v383, %v323
      %v394 = vsel %vm390, %v386, %v324
      %v396 = vsel %vm390, %v389, %v321
      %vm397 = vcmask 1045504
      %v399 = vsel %vm397, %v392, %v333
      %v402 = vsel %vm397, %v394, %v334
      %v405 = vsel %vm397, %v396, %v331
      %v409 = vsel %vm380, %v342, %v351
      %v412 = vsel %vm380, %v343, %v352
      %v415 = vsel %vm380, %v340, %v349
      %v417 = vsel %vm390, %v409, %v360
      %v419 = vsel %vm390, %v412, %v361
      %v421 = vsel %vm390, %v415, %v358
      %v423 = vsel %vm397, %v417, %v369
      %v426 = vsel %vm397, %v419, %v370
      %v429 = vsel %vm397, %v421, %v367
      %v431 = vld [vmem:[%s1] sm:$0x3]
      %vm432 = vcmask 293888
      %v434 = vsel %vm432, %v431, 0
      %v437 = vsel %vm380, %v378, 0
      %v440 = vsel %vm380, %v379, 0
      %v443 = vsel %vm380, %v376, 0
      %445 = vmatprep.subr.bf16.mxu0 %v402
      %446 = vmatpush1.bf16.msra.mxu0 %v399
      %447 = vmatprep.subr.bf16.mxu0 %v426
      %448 = vmatpush1.bf16.msra.mxu0 %v423
      %449 = vmatprep.subr.bf16.mxu0 %v440
      %450 = vmatpush1.bf16.msra.mxu0 %v437
      %451 = vmatprep.subr.bf16.mxu0 0
      %452 = vmatpush1.bf16.msra.mxu0 0
      %453 = vmatprep.subr.bf16.mxu0 0
      %454 = vmatpush1.bf16.msra.mxu0 0
      %455 = vmatprep.subr.bf16.mxu0 0
      %456 = vmatpush1.bf16.msra.mxu0 0
      %457 = vmatprep.subr.bf16.mxu0 0
      %458 = vmatpush1.bf16.msra.mxu0 0
      %459 = vmatprep.subr.bf16.mxu0 0
      %460 = vmatpush1.bf16.msra.mxu0 0
      %461 = vmatprep.subr.bf16.mxu0 0
      %462 = vmatpush1.bf16.msra.mxu0 0
      %463 = vmatprep.subr.bf16.mxu0 0
      %464 = vmatpush1.bf16.msra.mxu0 0
      %465 = vmatprep.subr.bf16.mxu0 0
      %466 = vmatpush1.bf16.msra.mxu0 0
      %467 = vmatprep.subr.bf16.mxu0 0
      %468 = vmatpush1.bf16.msra.mxu0 0
      %469 = vmatprep.subr.bf16.mxu0 0
      %470 = vmatpush1.bf16.msra.mxu0 0
      %471 = vmatprep.subr.bf16.mxu0 0
      %472 = vmatpush1.bf16.msra.mxu0 0
      %473 = vmatprep.subr.bf16.mxu0 0
      %474 = vmatpush1.bf16.msra.mxu0 0
      %475 = vmatprep.subr.bf16.mxu0 0
      %476 = vmatpush1.bf16.msra.mxu0 0
      %477 = vmatprep.mubr.bf16.mxu0 0
      %478 = vmatmul.mubr.bf16.gmra.mrb[0].mxu0 %v434
      %v479 = vpop.f32.mrb[0].mxu0
      %v480 = vadd.f32 0.0, %v479
      %v481 = vpop.f32.mrb[0].mxu0
      %v482 = vadd.f32 0.0, %v481
      %v483 = vpop.f32.mrb[0].mxu0
      %v484 = vpop.f32.mrb[0].mxu0
      %485 = vdwg.mxu0
      %486 = vmatprep.subr.bf16.mxu0 0
      %487 = vmatpush1.bf16.msra.mxu0 %v405
      %488 = vmatprep.subr.bf16.mxu0 0
      %489 = vmatpush1.bf16.msra.mxu0 %v429
      %490 = vmatprep.subr.bf16.mxu0 0
      %491 = vmatpush1.bf16.msra.mxu0 %v443
      %492 = vmatprep.subr.bf16.mxu0 0
      %493 = vmatpush1.bf16.msra.mxu0 0
      %494 = vmatprep.subr.bf16.mxu0 0
      %495 = vmatpush1.bf16.msra.mxu0 0
      %496 = vmatprep.subr.bf16.mxu0 0
      %497 = vmatpush1.bf16.msra.mxu0 0
      %498 = vmatprep.subr.bf16.mxu0 0
      %499 = vmatpush1.bf16.msra.mxu0 0
      %500 = vmatprep.subr.bf16.mxu0 0
      %501 = vmatpush1.bf16.msra.mxu0 0
      %502 = vmatprep.subr.bf16.mxu0 0
      %503 = vmatpush1.bf16.msra.mxu0 0
      %504 = vmatprep.subr.bf16.mxu0 0
      %505 = vmatpush1.bf16.msra.mxu0 0
      %506 = vmatprep.subr.bf16.mxu0 0
      %507 = vmatpush1.bf16.msra.mxu0 0
      %508 = vmatprep.subr.bf16.mxu0 0
      %509 = vmatpush1.bf16.msra.mxu0 0
      %510 = vmatprep.subr.bf16.mxu0 0
      %511 = vmatpush1.bf16.msra.mxu0 0
      %512 = vmatprep.subr.bf16.mxu0 0
      %513 = vmatpush1.bf16.msra.mxu0 0
      %514 = vmatprep.subr.bf16.mxu0 0
      %515 = vmatpush1.bf16.msra.mxu0 0
      %516 = vmatprep.subr.bf16.mxu0 0
      %517 = vmatpush1.bf16.msra.mxu0 0
      %518 = vmatprep.mubr.bf16.mxu0 0
      %519 = vmatmul.mubr.bf16.gmra.mrb[0].mxu0 %v434
      %v520 = vpop.f32.mrb[0].mxu0
      %v521 = vadd.f32 0.0, %v520
      %v522 = vpop.f32.mrb[0].mxu0
      %v523 = vpop.f32.mrb[0].mxu0
      %v524 = vpop.f32.mrb[0].mxu0
      %525 = vdwg.mxu0
      %v526 = vld [vmem:[%s5] ss:$4 sm:$0x7]
      %v527 = vld [vmem:[%s4] sm:$0xf]
      %v529 = vlaneseq
      %v530 = vshrl.u32 %v529, 7
      %v531 = vsub.s32 0, %v530
      %v532 = vrot.slane %v526, %v531
      %v533 = vlaneseq
      %v534 = vshrl.u32 %v533, 7
      %v535 = vsub.s32 1, %v534
      %v536 = vrot.slane %v526, %v535
      %v537 = vlaneseq
      %v538 = vshrl.u32 %v537, 7
      %v539 = vsub.s32 2, %v538
      %v540 = vrot.slane %v526, %v539
      %v544 = vmul.f32 %v480, %v532
      %v545 = vmul.f32 %v482, %v536
      %v546 = vmul.f32 %v521, %v540
      %v547 = vsel %vm390, %v544, 0.0
      %v548 = vsel %vm390, %v545, 0.0
      %v549 = vadd.f32 %v547, %v548
      %vm550 = vcmask 257024
      %v551 = vsel %vm550, %v546, 0.0
      %v552 = vadd.f32 %v549, %v551
      %553 = vadd.xlane.f32.xlu0 %v552
      %v554 = vpop.xlane.xlu0 %553
      %v555 = vmul.f32 %v554, 0.00390625
      %v556 = vmul.f32 %v544, %v480
      %v557 = vmul.f32 %v545, %v482
      %v558 = vmul.f32 %v546, %v521
      %v559 = vsel %vm390, %v556, 0.0
      %v560 = vsel %vm390, %v557, 0.0
      %v561 = vadd.f32 %v559, %v560
      %v562 = vsel %vm550, %v558, 0.0
      %v563 = vadd.f32 %v561, %v562
      %564 = vadd.xlane.f32.xlu0 %v563
      %v565 = vpop.xlane.xlu0 %564
      %v566 = vmul.f32 %v565, 0.00390625
      %v567 = vmul.f32 %v555, %v555
      %v568 = vsub.f32 %v566, %v567
      %v569 = vadd.f32 %v568, 1e-05
      %v570 = vrsqrt.pop %v569
      %v571 = vmul.f32 %v527, %v570
      %v572 = vmul.f32 %v555, %v571
      %574 = vrot.lane.b32.xlu0 %v572, 1
      %v575 = vpop.permute.xlu0 %574
      %v577 = vsub.f32 %v527, %v575
      %579 = vset.pattern.permute.xlu0 0
      %580 = vperm.xlu0 %579, %v571
      %v581 = vpop.permute.xlu0 %580
      %v583 = vmul.f32 %v480, %v581
      %v584 = vmul.f32 %v482, %v581
      %v585 = vmul.f32 %v521, %v581
      %587 = vset.pattern.permute.xlu0 1
      %588 = vperm.xlu0 %587, %v577
      %v589 = vpop.permute.xlu0 %588
      %v591 = vadd.f32 %v583, %v589
      %v592 = vadd.f32 %v584, %v589
      %v593 = vadd.f32 %v585, %v589
      %v594 = vmax.f32 %v591, 0.0
      %v595 = vmax.f32 %v592, 0.0
      %v596 = vmax.f32 %v593, 0.0
      %600 = vrot.lane.b32.xlu0 %v594, 19
      %v601 = vpop.permute.xlu0 %600
      %602 = vrot.lane.b32.xlu0 %v595, 19
      %v603 = vpop.permute.xlu0 %602
      %604 = vrot.lane.b32.xlu0 %v596, 19
      %v605 = vpop.permute.xlu0 %604
      %vm606 = vcmask 154624
      %v607 = vsel %vm606, %v601, %v603
      %v608 = vsel %vm606, %v603, %v605
      %v612 = vsel %vm606, 0.0, %v601
      %vm613 = vcmask 416768
      %v614 = vsel %vm613, %v608, 0.0
      %616 = vrot.lane.b32.xlu0 %v612, 92
      %v617 = vpop.permute.xlu0 %616
      %620 = vrot.lane.b32.xlu0 %v614, 36
      %v621 = vpop.permute.xlu0 %620
      %vm623 = vcmask 146432
      %v624 = vsel %vm623, %v617, %v612
      %vm625 = vcmask 408576
      %v626 = vsel %vm625, %v614, %v621
      %s627 = scalar_lea.vmem %s5, 1
      %v628 = vld [vmem:[%s627] ss:$4 sm:$0x7]
      %s629 = scalar_lea.vmem %s5, 2
      %v630 = vld [vmem:[%s629] ss:$4 sm:$0x7]
      %633 = vrot.lane.b32.xlu0 %v624, 126
      %v634 = vpop.permute.xlu0 %633
      %635 = vrot.lane.b32.xlu0 %v607, 126
      %v636 = vpop.permute.xlu0 %635
      %637 = vrot.lane.b32.xlu0 %v626, 126
      %v638 = vpop.permute.xlu0 %637
      %vm639 = vcmask 1031168
      %v640 = vsel %vm639, %v634, %v636
      %v641 = vsel %vm639, %v636, %v638
      %645 = vrot.lane.b32.xlu0 %v624, 66
      %v646 = vpop.permute.xlu0 %645
      %vm648 = vcmask 539648
      %v649 = vsel %vm648, %v638, %v646
      %650 = vrot.lane.b32.xlu0 %v626, 62
      %v651 = vpop.permute.xlu0 %650
      %653 = vrot.lane.b32.xlu0 %v624, 2
      %v654 = vpop.permute.xlu0 %653
      %655 = vrot.lane.b32.xlu0 %v607, 2
      %v656 = vpop.permute.xlu0 %655
      %657 = vrot.lane.b32.xlu0 %v626, 2
      %v658 = vpop.permute.xlu0 %657
      %vm659 = vcmask 15360
      %v660 = vsel %vm659, %v654, %v656
      %v661 = vsel %vm659, %v656, %v658
      %v665 = vsel %vm659, %v651, %v654
      %v666 = vsub.f32 1.0, %v628
      %v667 = vsub.f32 %v666, %v630
      %v669 = vlaneseq
      %v670 = vshrl.u32 %v669, 7
      %v671 = vsub.s32 0, %v670
      %v672 = vrot.slane %v667, %v671
      %v673 = vlaneseq
      %v674 = vshrl.u32 %v673, 7
      %v675 = vsub.s32 1, %v674
      %v676 = vrot.slane %v667, %v675
      %v677 = vlaneseq
      %v678 = vshrl.u32 %v677, 7
      %v679 = vsub.s32 2, %v678
      %v680 = vrot.slane %v667, %v679
      %v684 = vmul.f32 %v624, %v672
      %v685 = vmul.f32 %v607, %v676
      %v686 = vmul.f32 %v626, %v680
      %v688 = vlaneseq
      %v689 = vshrl.u32 %v688, 7
      %v690 = vsub.s32 0, %v689
      %v691 = vrot.slane %v628, %v690
      %v692 = vlaneseq
      %v693 = vshrl.u32 %v692, 7
      %v694 = vsub.s32 1, %v693
      %v695 = vrot.slane %v628, %v694
      %v696 = vlaneseq
      %v697 = vshrl.u32 %v696, 7
      %v698 = vsub.s32 2, %v697
      %v699 = vrot.slane %v628, %v698
      %v703 = vmul.f32 %v640, %v691
      %v704 = vmul.f32 %v641, %v695
      %v705 = vmul.f32 %v649, %v699
      %v706 = vadd.f32 %v684, %v703
      %v707 = vadd.f32 %v685, %v704
      %v708 = vadd.f32 %v686, %v705
      %v710 = vlaneseq
      %v711 = vshrl.u32 %v710, 7
      %v712 = vsub.s32 0, %v711
      %v713 = vrot.slane %v630, %v712
      %v714 = vlaneseq
      %v715 = vshrl.u32 %v714, 7
      %v716 = vsub.s32 1, %v715
      %v717 = vrot.slane %v630, %v716
      %v718 = vlaneseq
      %v719 = vshrl.u32 %v718, 7
      %v720 = vsub.s32 2, %v719
      %v721 = vrot.slane %v630, %v720
      %v725 = vmul.f32 %v665, %v713
      %v726 = vmul.f32 %v660, %v717
      %v727 = vmul.f32 %v661, %v721
      %v728 = vadd.f32 %v706, %v725
      %v729 = vadd.f32 %v707, %v726
      %v730 = vadd.f32 %v708, %v727
      %vm731 = vcmask 556032
      %v732 = vsel %vm731, %v730, 0.0
      %v733 = vpack.c.bf16 %v728, %v728
      %v734 = vpack.c.bf16 %v729, %v729
      %v735 = vpack.c.bf16 %v732, %v732
      %v739 = vrot.slane %v733, 6
      %v740 = vrot.slane %v734, 6
      %v741 = vrot.slane %v735, 6
      %742 = vrot.lane.b32.xlu0 %v739, 127
      %v743 = vpop.permute.xlu0 %742
      %744 = vrot.lane.b32.xlu0 %v740, 127
      %v745 = vpop.permute.xlu0 %744
      %746 = vrot.lane.b32.xlu0 %v741, 127
      %v747 = vpop.permute.xlu0 %746
      %v748 = vsel %vm311, %v743, %v745
      %v749 = vsel %vm311, %v745, %v747
      %v750 = vrot.slane %v733, 4
      %v751 = vrot.slane %v734, 4
      %v752 = vrot.slane %v735, 4
      %753 = vrot.lane.b32.xlu0 %v750, 126
      %v754 = vpop.permute.xlu0 %753
      %755 = vrot.lane.b32.xlu0 %v751, 126
      %v756 = vpop.permute.xlu0 %755
      %757 = vrot.lane.b32.xlu0 %v752, 126
      %v758 = vpop.permute.xlu0 %757
      %v759 = vsel %vm322, %v754, %v756
      %v760 = vsel %vm322, %v756, %v758
      %v761 = vrot.slane %v733, 2
      %v762 = vrot.slane %v734, 2
      %v763 = vrot.slane %v735, 2
      %764 = vrot.lane.b32.xlu0 %v761, 110
      %v765 = vpop.permute.xlu0 %764
      %766 = vrot.lane.b32.xlu0 %v762, 110
      %v767 = vpop.permute.xlu0 %766
      %768 = vrot.lane.b32.xlu0 %v763, 110
      %v769 = vpop.permute.xlu0 %768
      %v770 = vsel %vm332, %v765, %v767
      %v771 = vsel %vm332, %v767, %v769
      %772 = vrot.lane.b32.xlu0 %v733, 109
      %v773 = vpop.permute.xlu0 %772
      %774 = vrot.lane.b32.xlu0 %v734, 109
      %v775 = vpop.permute.xlu0 %774
      %776 = vrot.lane.b32.xlu0 %v735, 109
      %v777 = vpop.permute.xlu0 %776
      %v778 = vsel %vm341, %v773, %v775
      %v779 = vsel %vm341, %v775, %v777
      %780 = vrot.lane.b32.xlu0 %v739, 108
      %v781 = vpop.permute.xlu0 %780
      %782 = vrot.lane.b32.xlu0 %v740, 108
      %v783 = vpop.permute.xlu0 %782
      %784 = vrot.lane.b32.xlu0 %v741, 108
      %v785 = vpop.permute.xlu0 %784
      %v786 = vsel %vm350, %v781, %v783
      %v787 = vsel %vm350, %v783, %v785
      %788 = vrot.lane.b32.xlu0 %v750, 92
      %v789 = vpop.permute.xlu0 %788
      %790 = vrot.lane.b32.xlu0 %v751, 92
      %v791 = vpop.permute.xlu0 %790
      %792 = vrot.lane.b32.xlu0 %v752, 92
      %v793 = vpop.permute.xlu0 %792
      %v794 = vsel %vm359, %v789, %v791
      %v795 = vsel %vm359, %v791, %v793
      %796 = vrot.lane.b32.xlu0 %v761, 91
      %v797 = vpop.permute.xlu0 %796
      %798 = vrot.lane.b32.xlu0 %v762, 91
      %v799 = vpop.permute.xlu0 %798
      %800 = vrot.lane.b32.xlu0 %v763, 91
      %v801 = vpop.permute.xlu0 %800
      %v802 = vsel %vm368, %v797, %v799
      %v803 = vsel %vm368, %v799, %v801
      %804 = vrot.lane.b32.xlu0 %v733, 90
      %v805 = vpop.permute.xlu0 %804
      %806 = vrot.lane.b32.xlu0 %v734, 90
      %v807 = vpop.permute.xlu0 %806
      %808 = vrot.lane.b32.xlu0 %v735, 90
      %v809 = vpop.permute.xlu0 %808
      %v810 = vsel %vm377, %v805, %v807
      %v811 = vsel %vm377, %v807, %v809
      %v814 = vsel %vm380, %v733, %v748
      %v817 = vsel %vm380, %v734, %v749
      %v820 = vsel %vm380, %v735, %v747
      %v822 = vsel %vm390, %v814, %v759
      %v824 = vsel %vm390, %v817, %v760
      %v826 = vsel %vm390, %v820, %v758
      %v828 = vsel %vm397, %v822, %v770
      %v831 = vsel %vm397, %v824, %v771
      %v834 = vsel %vm397, %v826, %v769
      %v838 = vsel %vm380, %v778, %v786
      %v841 = vsel %vm380, %v779, %v787
      %v844 = vsel %vm380, %v777, %v785
      %v846 = vsel %vm390, %v838, %v794
      %v848 = vsel %vm390, %v841, %v795
      %v850 = vsel %vm390, %v844, %v793
      %v852 = vsel %vm397, %v846, %v802
      %v855 = vsel %vm397, %v848, %v803
      %v858 = vsel %vm397, %v850, %v801
      %v860 = vld [vmem:[%s2] sm:$0x3]
      %v862 = vsel %vm432, %v860, 0
      %v865 = vsel %vm380, %v810, 0
      %v868 = vsel %vm380, %v811, 0
      %v871 = vsel %vm380, %v809, 0
      %873 = vmatprep.subr.bf16.mxu0 %v831
      %874 = vmatpush1.bf16.msra.mxu0 %v828
      %875 = vmatprep.subr.bf16.mxu0 %v855
      %876 = vmatpush1.bf16.msra.mxu0 %v852
      %877 = vmatprep.subr.bf16.mxu0 %v868
      %878 = vmatpush1.bf16.msra.mxu0 %v865
      %879 = vmatprep.subr.bf16.mxu0 0
      %880 = vmatpush1.bf16.msra.mxu0 0
      %881 = vmatprep.subr.bf16.mxu0 0
      %882 = vmatpush1.bf16.msra.mxu0 0
      %883 = vmatprep.subr.bf16.mxu0 0
      %884 = vmatpush1.bf16.msra.mxu0 0
      %885 = vmatprep.subr.bf16.mxu0 0
      %886 = vmatpush1.bf16.msra.mxu0 0
      %887 = vmatprep.subr.bf16.mxu0 0
      %888 = vmatpush1.bf16.msra.mxu0 0
      %889 = vmatprep.subr.bf16.mxu0 0
      %890 = vmatpush1.bf16.msra.mxu0 0
      %891 = vmatprep.subr.bf16.mxu0 0
      %892 = vmatpush1.bf16.msra.mxu0 0
      %893 = vmatprep.subr.bf16.mxu0 0
      %894 = vmatpush1.bf16.msra.mxu0 0
      %895 = vmatprep.subr.bf16.mxu0 0
      %896 = vmatpush1.bf16.msra.mxu0 0
      %897 = vmatprep.subr.bf16.mxu0 0
      %898 = vmatpush1.bf16.msra.mxu0 0
      %899 = vmatprep.subr.bf16.mxu0 0
      %900 = vmatpush1.bf16.msra.mxu0 0
      %901 = vmatprep.subr.bf16.mxu0 0
      %902 = vmatpush1.bf16.msra.mxu0 0
      %903 = vmatprep.subr.bf16.mxu0 0
      %904 = vmatpush1.bf16.msra.mxu0 0
      %905 = vmatprep.mubr.bf16.mxu0 0
      %906 = vmatmul.mubr.bf16.gmra.mrb[0].mxu0 %v862
      %v907 = vpop.f32.mrb[0].mxu0
      %v908 = vadd.f32 0.0, %v907
      %v909 = vpop.f32.mrb[0].mxu0
      %v910 = vadd.f32 0.0, %v909
      %v911 = vpop.f32.mrb[0].mxu0
      %v912 = vpop.f32.mrb[0].mxu0
      %913 = vdwg.mxu0
      %914 = vmatprep.subr.bf16.mxu0 0
      %915 = vmatpush1.bf16.msra.mxu0 %v834
      %916 = vmatprep.subr.bf16.mxu0 0
      %917 = vmatpush1.bf16.msra.mxu0 %v858
      %918 = vmatprep.subr.bf16.mxu0 0
      %919 = vmatpush1.bf16.msra.mxu0 %v871
      %920 = vmatprep.subr.bf16.mxu0 0
      %921 = vmatpush1.bf16.msra.mxu0 0
      %922 = vmatprep.subr.bf16.mxu0 0
      %923 = vmatpush1.bf16.msra.mxu0 0
      %924 = vmatprep.subr.bf16.mxu0 0
      %925 = vmatpush1.bf16.msra.mxu0 0
      %926 = vmatprep.subr.bf16.mxu0 0
      %927 = vmatpush1.bf16.msra.mxu0 0
      %928 = vmatprep.subr.bf16.mxu0 0
      %929 = vmatpush1.bf16.msra.mxu0 0
      %930 = vmatprep.subr.bf16.mxu0 0
      %931 = vmatpush1.bf16.msra.mxu0 0
      %932 = vmatprep.subr.bf16.mxu0 0
      %933 = vmatpush1.bf16.msra.mxu0 0
      %934 = vmatprep.subr.bf16.mxu0 0
      %935 = vmatpush1.bf16.msra.mxu0 0
      %936 = vmatprep.subr.bf16.mxu0 0
      %937 = vmatpush1.bf16.msra.mxu0 0
      %938 = vmatprep.subr.bf16.mxu0 0
      %939 = vmatpush1.bf16.msra.mxu0 0
      %940 = vmatprep.subr.bf16.mxu0 0
      %941 = vmatpush1.bf16.msra.mxu0 0
      %942 = vmatprep.subr.bf16.mxu0 0
      %943 = vmatpush1.bf16.msra.mxu0 0
      %944 = vmatprep.subr.bf16.mxu0 0
      %945 = vmatpush1.bf16.msra.mxu0 0
      %946 = vmatprep.mubr.bf16.mxu0 0
      %947 = vmatmul.mubr.bf16.gmra.mrb[0].mxu0 %v862
      %v948 = vpop.f32.mrb[0].mxu0
      %v949 = vadd.f32 0.0, %v948
      %v950 = vpop.f32.mrb[0].mxu0
      %v951 = vpop.f32.mrb[0].mxu0
      %v952 = vpop.f32.mrb[0].mxu0
      %953 = vdwg.mxu0
      %v954 = vmul.f32 %v908, %v532
      %v955 = vmul.f32 %v910, %v536
      %v956 = vmul.f32 %v949, %v540
      %v957 = vsel %vm390, %v954, 0.0
      %v958 = vsel %vm390, %v955, 0.0
      %v959 = vadd.f32 %v957, %v958
      %v960 = vsel %vm550, %v956, 0.0
      %v961 = vadd.f32 %v959, %v960
      %962 = vadd.xlane.f32.xlu0 %v961
      %v963 = vpop.xlane.xlu0 %962
      %v964 = vmul.f32 %v963, 0.00390625
      %v965 = vmul.f32 %v954, %v908
      %v966 = vmul.f32 %v955, %v910
      %v967 = vmul.f32 %v956, %v949
      %v968 = vsel %vm390, %v965, 0.0
      %v969 = vsel %vm390, %v966, 0.0
      %v970 = vadd.f32 %v968, %v969
      %v971 = vsel %vm550, %v967, 0.0
      %v972 = vadd.f32 %v970, %v971
      %973 = vadd.xlane.f32.xlu0 %v972
      %v974 = vpop.xlane.xlu0 %973
      %v975 = vmul.f32 %v974, 0.00390625
      %v976 = vmul.f32 %v964, %v964
      %v977 = vsub.f32 %v975, %v976
      %v978 = vadd.f32 %v977, 1e-05
      %v979 = vrsqrt.pop %v978
      %v980 = vmul.f32 %v527, %v979
      %v981 = vmul.f32 %v964, %v980
      %983 = vrot.lane.b32.xlu0 %v981, 1
      %v984 = vpop.permute.xlu0 %983
      %v986 = vsub.f32 %v527, %v984
      %988 = vset.pattern.permute.xlu0 2
      %989 = vperm.xlu0 %988, %v980
      %v990 = vpop.permute.xlu0 %989
      %v992 = vmul.f32 %v908, %v990
      %v993 = vmul.f32 %v910, %v990
      %v994 = vmul.f32 %v949, %v990
      %996 = vset.pattern.permute.xlu0 3
      %997 = vperm.xlu0 %996, %v986
      %v998 = vpop.permute.xlu0 %997
      %v1000 = vadd.f32 %v992, %v998
      %v1001 = vadd.f32 %v993, %v998
      %v1002 = vadd.f32 %v994, %v998
      %v1003 = vmax.f32 %v1000, 0.0
      %v1004 = vmax.f32 %v1001, 0.0
      %v1005 = vmax.f32 %v1002, 0.0
      %v1006 = vld [vmem:[%s3] sm:$0x3]
      %vm1007 = vcmask 31744
      %v1009 = vsel %vm1007, %v1006, 0
      %v1011 = vsel %vm380, %v342, 0
      %v1013 = vsel %vm380, %v343, 0
      %v1015 = vsel %vm380, %v340, 0
      %1017 = vmatprep.subr.bf16.mxu0 %v1013
      %1018 = vmatpush1.bf16.msra.mxu0 %v1011
      %1019 = vmatprep.subr.bf16.mxu0 0
      %1020 = vmatpush1.bf16.msra.mxu0 0
      %1021 = vmatprep.subr.bf16.mxu0 0
      %1022 = vmatpush1.bf16.msra.mxu0 0
      %1023 = vmatprep.subr.bf16.mxu0 0
      %1024 = vmatpush1.bf16.msra.mxu0 0
      %1025 = vmatprep.subr.bf16.mxu0 0
      %1026 = vmatpush1.bf16.msra.mxu0 0
      %1027 = vmatprep.subr.bf16.mxu0 0
      %1028 = vmatpush1.bf16.msra.mxu0 0
      %1029 = vmatprep.subr.bf16.mxu0 0
      %1030 = vmatpush1.bf16.msra.mxu0 0
      %1031 = vmatprep.subr.bf16.mxu0 0
      %1032 = vmatpush1.bf16.msra.mxu0 0
      %1033 = vmatprep.subr.bf16.mxu0 0
      %1034 = vmatpush1.bf16.msra.mxu0 0
      %1035 = vmatprep.subr.bf16.mxu0 0
      %1036 = vmatpush1.bf16.msra.mxu0 0
      %1037 = vmatprep.subr.bf16.mxu0 0
      %1038 = vmatpush1.bf16.msra.mxu0 0
      %1039 = vmatprep.subr.bf16.mxu0 0
      %1040 = vmatpush1.bf16.msra.mxu0 0
      %1041 = vmatprep.subr.bf16.mxu0 0
      %1042 = vmatpush1.bf16.msra.mxu0 0
      %1043 = vmatprep.subr.bf16.mxu0 0
      %1044 = vmatpush1.bf16.msra.mxu0 0
      %1045 = vmatprep.subr.bf16.mxu0 0
      %1046 = vmatpush1.bf16.msra.mxu0 0
      %1047 = vmatprep.subr.bf16.mxu0 0
      %1048 = vmatpush1.bf16.msra.mxu0 0
      %1049 = vmatprep.mubr.bf16.mxu0 0
      %1050 = vmatmul.mubr.bf16.gmra.mrb[0].mxu0 %v1009
      %v1051 = vpop.f32.mrb[0].mxu0
      %v1052 = vadd.f32 0.0, %v1051
      %v1053 = vpop.f32.mrb[0].mxu0
      %v1054 = vadd.f32 0.0, %v1053
      %v1055 = vpop.f32.mrb[0].mxu0
      %v1056 = vpop.f32.mrb[0].mxu0
      %1057 = vdwg.mxu0
      %1058 = vmatprep.subr.bf16.mxu0 0
      %1059 = vmatpush1.bf16.msra.mxu0 %v1015
      %1060 = vmatprep.subr.bf16.mxu0 0
      %1061 = vmatpush1.bf16.msra.mxu0 0
      %1062 = vmatprep.subr.bf16.mxu0 0
      %1063 = vmatpush1.bf16.msra.mxu0 0
      %1064 = vmatprep.subr.bf16.mxu0 0
      %1065 = vmatpush1.bf16.msra.mxu0 0
      %1066 = vmatprep.subr.bf16.mxu0 0
      %1067 = vmatpush1.bf16.msra.mxu0 0
      %1068 = vmatprep.subr.bf16.mxu0 0
      %1069 = vmatpush1.bf16.msra.mxu0 0
      %1070 = vmatprep.subr.bf16.mxu0 0
      %1071 = vmatpush1.bf16.msra.mxu0 0
      %1072 = vmatprep.subr.bf16.mxu0 0
      %1073 = vmatpush1.bf16.msra.mxu0 0
      %1074 = vmatprep.subr.bf16.mxu0 0
      %1075 = vmatpush1.bf16.msra.mxu0 0
      %1076 = vmatprep.subr.bf16.mxu0 0
      %1077 = vmatpush1.bf16.msra.mxu0 0
      %1078 = vmatprep.subr.bf16.mxu0 0
      %1079 = vmatpush1.bf16.msra.mxu0 0
      %1080 = vmatprep.subr.bf16.mxu0 0
      %1081 = vmatpush1.bf16.msra.mxu0 0
      %1082 = vmatprep.subr.bf16.mxu0 0
      %1083 = vmatpush1.bf16.msra.mxu0 0
      %1084 = vmatprep.subr.bf16.mxu0 0
      %1085 = vmatpush1.bf16.msra.mxu0 0
      %1086 = vmatprep.subr.bf16.mxu0 0
      %1087 = vmatpush1.bf16.msra.mxu0 0
      %1088 = vmatprep.subr.bf16.mxu0 0
      %1089 = vmatpush1.bf16.msra.mxu0 0
      %1090 = vmatprep.mubr.bf16.mxu0 0
      %1091 = vmatmul.mubr.bf16.gmra.mrb[0].mxu0 %v1009
      %v1092 = vpop.f32.mrb[0].mxu0
      %v1093 = vadd.f32 0.0, %v1092
      %v1094 = vpop.f32.mrb[0].mxu0
      %v1095 = vpop.f32.mrb[0].mxu0
      %v1096 = vpop.f32.mrb[0].mxu0
      %1097 = vdwg.mxu0
      %v1098 = vmul.f32 %v1052, %v532
      %v1099 = vmul.f32 %v1054, %v536
      %v1100 = vmul.f32 %v1093, %v540
      %v1101 = vsel %vm390, %v1098, 0.0
      %v1102 = vsel %vm390, %v1099, 0.0
      %v1103 = vadd.f32 %v1101, %v1102
      %v1104 = vsel %vm550, %v1100, 0.0
      %v1105 = vadd.f32 %v1103, %v1104
      %1106 = vadd.xlane.f32.xlu0 %v1105
      %v1107 = vpop.xlane.xlu0 %1106
      %v1108 = vmul.f32 %v1107, 0.00390625
      %v1109 = vmul.f32 %v1098, %v1052
      %v1110 = vmul.f32 %v1099, %v1054
      %v1111 = vmul.f32 %v1100, %v1093
      %v1112 = vsel %vm390, %v1109, 0.0
      %v1113 = vsel %vm390, %v1110, 0.0
      %v1114 = vadd.f32 %v1112, %v1113
      %v1115 = vsel %vm550, %v1111, 0.0
      %v1116 = vadd.f32 %v1114, %v1115
      %1117 = vadd.xlane.f32.xlu0 %v1116
      %v1118 = vpop.xlane.xlu0 %1117
      %v1119 = vmul.f32 %v1118, 0.00390625
      %v1120 = vmul.f32 %v1108, %v1108
      %v1121 = vsub.f32 %v1119, %v1120
      %v1122 = vadd.f32 %v1121, 1e-05
      %v1123 = vrsqrt.pop %v1122
      %v1124 = vmul.f32 %v527, %v1123
      %v1125 = vmul.f32 %v1108, %v1124
      %1127 = vrot.lane.b32.xlu0 %v1125, 1
      %v1128 = vpop.permute.xlu0 %1127
      %v1130 = vsub.f32 %v527, %v1128
      %1132 = vset.pattern.permute.xlu0 4
      %1133 = vperm.xlu0 %1132, %v1124
      %v1134 = vpop.permute.xlu0 %1133
      %v1136 = vmul.f32 %v1052, %v1134
      %v1137 = vmul.f32 %v1054, %v1134
      %v1138 = vmul.f32 %v1093, %v1134
      %1140 = vset.pattern.permute.xlu0 5
      %1141 = vperm.xlu0 %1140, %v1130
      %v1142 = vpop.permute.xlu0 %1141
      %v1144 = vadd.f32 %v1136, %v1142
      %v1145 = vadd.f32 %v1137, %v1142
      %v1146 = vadd.f32 %v1138, %v1142
      %v1147 = vmax.f32 %v1144, 0.0
      %v1148 = vmax.f32 %v1145, 0.0
      %v1149 = vmax.f32 %v1146, 0.0
      %v1150 = vadd.f32 %v1003, %v1147
      %v1151 = vadd.f32 %v1004, %v1148
      %v1152 = vadd.f32 %v1005, %v1149
      %v1153 = vld [vmem:[%s6] sm:$0xff]
      %v1154 = vld [vmem:[%s6 + $0x8] sm:$0xff]
      %v1155 = vld [vmem:[%s6 + $0x10] sm:$0xff]
      %v1156 = vld [vmem:[%s6 + $0x18] sm:$0xff]
      %v1157 = vld [vmem:[%s6 + $0x20] sm:$0xff]
      %v1158 = vld [vmem:[%s6 + $0x28] sm:$0xff]
      %v1159 = vld [vmem:[%s6 + $0x30] sm:$0xff]
      %v1160 = vld [vmem:[%s6 + $0x38] sm:$0xff]
      %v1161 = vld [vmem:[%s6 + $0x40] sm:$0xff]
      %v1162 = vld [vmem:[%s6 + $0x48] sm:$0xff]
      %v1163 = vld [vmem:[%s6 + $0x50] sm:$0xff]
      %v1164 = vld [vmem:[%s6 + $0x58] sm:$0xff]
      %v1165 = vld [vmem:[%s6 + $0x60] sm:$0xff]
      %v1166 = vld [vmem:[%s6 + $0x68] sm:$0xff]
      %v1167 = vld [vmem:[%s6 + $0x70] sm:$0xff]
      %v1168 = vld [vmem:[%s6 + $0x78] sm:$0xff]
      %v1169 = vld [vmem:[%s6 + $0x80] sm:$0xff]
      %v1170 = vld [vmem:[%s6 + $0x88] sm:$0xff]
      %v1171 = vld [vmem:[%s6 + $0x90] sm:$0xff]
      %v1172 = vld [vmem:[%s6 + $0x98] sm:$0xff]
      %v1173 = vld [vmem:[%s6 + $0xa0] sm:$0xff]
      %v1174 = vld [vmem:[%s6 + $0xa8] sm:$0xff]
      %v1175 = vld [vmem:[%s6 + $0xb0] sm:$0xff]
      %v1176 = vld [vmem:[%s6 + $0xb8] sm:$0xff]
      %v1177 = vld [vmem:[%s6 + $0xc0] sm:$0xff]
      %v1178 = vld [vmem:[%s6 + $0xc8] sm:$0xff]
      %v1179 = vld [vmem:[%s6 + $0xd0] sm:$0xff]
      %v1180 = vld [vmem:[%s6 + $0xd8] sm:$0xff]
      %v1181 = vld [vmem:[%s6 + $0xe0] sm:$0xff]
      %v1182 = vld [vmem:[%s6 + $0xe8] sm:$0xff]
      %v1183 = vld [vmem:[%s6 + $0xf0] sm:$0xff]
      %v1184 = vld [vmem:[%s6 + $0xf8] sm:$0xff]
      %v1185 = vld [vmem:[%s6 + $0x100] sm:$0xff]
      %v1186 = vld [vmem:[%s6 + $0x108] sm:$0xff]
      %v1187 = vld [vmem:[%s6 + $0x110] sm:$0xff]
      %v1188 = vld [vmem:[%s6 + $0x118] sm:$0xff]
      %vm1189 = vcmask 261120
      %v1191 = vsel %vm1189, %v1152, 0
      %1193 = vmatprep.subr.mxu0 0.0
      %1194 = vmatpush1.msra.mxu0 %v1153
      %1195 = vmatprep.subr.mxu0 0.0
      %1196 = vmatpush1.msra.mxu0 %v1154
      %1197 = vmatprep.subr.mxu0 0.0
      %1198 = vmatpush1.msra.mxu0 %v1155
      %1199 = vmatprep.subr.mxu0 0.0
      %1200 = vmatpush1.msra.mxu0 %v1156
      %1201 = vmatprep.subr.mxu0 0.0
      %1202 = vmatpush1.msra.mxu0 %v1157
      %1203 = vmatprep.subr.mxu0 0.0
      %1204 = vmatpush1.msra.mxu0 %v1158
      %1205 = vmatprep.subr.mxu0 0.0
      %1206 = vmatpush1.msra.mxu0 %v1159
      %1207 = vmatprep.subr.mxu0 0.0
      %1208 = vmatpush1.msra.mxu0 %v1160
      %1209 = vmatprep.subr.mxu0 0.0
      %1210 = vmatpush1.msra.mxu0 %v1161
      %1211 = vmatprep.subr.mxu0 0.0
      %1212 = vmatpush1.msra.mxu0 %v1162
      %1213 = vmatprep.subr.mxu0 0.0
      %1214 = vmatpush1.msra.mxu0 %v1163
      %1215 = vmatprep.subr.mxu0 0.0
      %1216 = vmatpush1.msra.mxu0 %v1164
      %1217 = vmatprep.subr.mxu0 0.0
      %1218 = vmatpush1.msra.mxu0 %v1165
      %1219 = vmatprep.subr.mxu0 0.0
      %1220 = vmatpush1.msra.mxu0 %v1166
      %1221 = vmatprep.subr.mxu0 0.0
      %1222 = vmatpush1.msra.mxu0 %v1167
      %1223 = vmatprep.subr.mxu0 0.0
      %1224 = vmatpush1.msra.mxu0 %v1168
      %1225 = vmatprep.subr.mxu0 0.0
      %1226 = vmatpush1.msra.mxu0 %v1169
      %1227 = vmatprep.subr.mxu0 0.0
      %1228 = vmatpush1.msra.mxu0 %v1170
      %1229 = vmatprep.subr.mxu0 0.0
      %1230 = vmatpush1.msra.mxu0 %v1171
      %1231 = vmatprep.subr.mxu0 0.0
      %1232 = vmatpush1.msra.mxu0 %v1172
      %1233 = vmatprep.subr.mxu0 0.0
      %1234 = vmatpush1.msra.mxu0 %v1173
      %1235 = vmatprep.subr.mxu0 0.0
      %1236 = vmatpush1.msra.mxu0 %v1174
      %1237 = vmatprep.subr.mxu0 0.0
      %1238 = vmatpush1.msra.mxu0 %v1175
      %1239 = vmatprep.subr.mxu0 0.0
      %1240 = vmatpush1.msra.mxu0 %v1176
      %1241 = vmatprep.subr.mxu0 0.0
      %1242 = vmatpush1.msra.mxu0 %v1177
      %1243 = vmatprep.subr.mxu0 0.0
      %1244 = vmatpush1.msra.mxu0 %v1178
      %1245 = vmatprep.subr.mxu0 0.0
      %1246 = vmatpush1.msra.mxu0 %v1179
      %1247 = vmatprep.subr.mxu0 0.0
      %1248 = vmatpush1.msra.mxu0 %v1180
      %1249 = vmatprep.subr.mxu0 0.0
      %1250 = vmatpush1.msra.mxu0 %v1181
      %1251 = vmatprep.subr.mxu0 0.0
      %1252 = vmatpush1.msra.mxu0 %v1182
      %1253 = vmatprep.subr.mxu0 0.0
      %1254 = vmatpush1.msra.mxu0 %v1183
      %1255 = vmatprep.subr.mxu0 0.0
      %1256 = vmatpush1.msra.mxu0 %v1184
      %1257 = vmatprep.mubr.f32.mxu0 %v1151
      %1258 = vmatmul.mubr.f32.gmra.mrb[0].mxu0 %v1150
      %v1259 = vpop.f32.mrb[0].mxu0
      %v1260 = vadd.f32 0.0, %v1259
      %v1261 = vpop.f32.mrb[0].mxu0
      %1262 = vdwg.mxu0
      %1263 = vmatprep.subr.mxu0 0.0
      %1264 = vmatpush1.msra.mxu0 %v1185
      %1265 = vmatprep.subr.mxu0 0.0
      %1266 = vmatpush1.msra.mxu0 %v1186
      %1267 = vmatprep.subr.mxu0 0.0
      %1268 = vmatpush1.msra.mxu0 %v1187
      %1269 = vmatprep.subr.mxu0 0.0
      %1270 = vmatpush1.msra.mxu0 %v1188
      %1271 = vmatprep.subr.mxu0 0.0
      %1272 = vmatpush1.msra.mxu0 0.0
      %1273 = vmatprep.subr.mxu0 0.0
      %1274 = vmatpush1.msra.mxu0 0.0
      %1275 = vmatprep.subr.mxu0 0.0
      %1276 = vmatpush1.msra.mxu0 0.0
      %1277 = vmatprep.subr.mxu0 0.0
      %1278 = vmatpush1.msra.mxu0 0.0
      %1279 = vmatprep.subr.mxu0 0.0
      %1280 = vmatpush1.msra.mxu0 0.0
      %1281 = vmatprep.subr.mxu0 0.0
      %1282 = vmatpush1.msra.mxu0 0.0
      %1283 = vmatprep.subr.mxu0 0.0
      %1284 = vmatpush1.msra.mxu0 0.0
      %1285 = vmatprep.subr.mxu0 0.0
      %1286 = vmatpush1.msra.mxu0 0.0
      %1287 = vmatprep.subr.mxu0 0.0
      %1288 = vmatpush1.msra.mxu0 0.0
      %1289 = vmatprep.subr.mxu0 0.0
      %1290 = vmatpush1.msra.mxu0 0.0
      %1291 = vmatprep.subr.mxu0 0.0
      %1292 = vmatpush1.msra.mxu0 0.0
      %1293 = vmatprep.subr.mxu0 0.0
      %1294 = vmatpush1.msra.mxu0 0.0
      %1295 = vmatprep.subr.mxu0 0.0
      %1296 = vmatpush1.msra.mxu0 0.0
      %1297 = vmatprep.subr.mxu0 0.0
      %1298 = vmatpush1.msra.mxu0 0.0
      %1299 = vmatprep.subr.mxu0 0.0
      %1300 = vmatpush1.msra.mxu0 0.0
      %1301 = vmatprep.subr.mxu0 0.0
      %1302 = vmatpush1.msra.mxu0 0.0
      %1303 = vmatprep.subr.mxu0 0.0
      %1304 = vmatpush1.msra.mxu0 0.0
      %1305 = vmatprep.subr.mxu0 0.0
      %1306 = vmatpush1.msra.mxu0 0.0
      %1307 = vmatprep.subr.mxu0 0.0
      %1308 = vmatpush1.msra.mxu0 0.0
      %1309 = vmatprep.subr.mxu0 0.0
      %1310 = vmatpush1.msra.mxu0 0.0
      %1311 = vmatprep.subr.mxu0 0.0
      %1312 = vmatpush1.msra.mxu0 0.0
      %1313 = vmatprep.subr.mxu0 0.0
      %1314 = vmatpush1.msra.mxu0 0.0
      %1315 = vmatprep.subr.mxu0 0.0
      %1316 = vmatpush1.msra.mxu0 0.0
      %1317 = vmatprep.subr.mxu0 0.0
      %1318 = vmatpush1.msra.mxu0 0.0
      %1319 = vmatprep.subr.mxu0 0.0
      %1320 = vmatpush1.msra.mxu0 0.0
      %1321 = vmatprep.subr.mxu0 0.0
      %1322 = vmatpush1.msra.mxu0 0.0
      %1323 = vmatprep.subr.mxu0 0.0
      %1324 = vmatpush1.msra.mxu0 0.0
      %1325 = vmatprep.subr.mxu0 0.0
      %1326 = vmatpush1.msra.mxu0 0.0
      %1327 = vmatprep.mubr.f32.mxu0 0.0
      %1328 = vmatmul.mubr.f32.gmra.mrb[0].mxu0 %v1191
      %v1329 = vpop.f32.mrb[0].mxu0
      %v1330 = vadd.f32 %v1260, %v1329
      %v1331 = vpop.f32.mrb[0].mxu0
      %1332 = vdwg.mxu0
      %vm1333 = vcmask 519168
      %1334 = vst.msk [vmem:[%s276] sm:$0xf] %vm1333, %v1330
      %p1335 = scmp.lt.s32.totalorder %s18, 1
      %s1336 = scalar_select %p1335, %s18, 1
      %s1337 = smul.addr %s1336, 4
      %s1338 = scalar_lea.vmem %s7, %s1337
      // Predicated region
      $region49: #{residual_block_forward.1} parent=47 // pred_check
        %p1339 = pneg %p188
      $region50: #{residual_block_forward.1} parent=47 // pred_check_branch
        %1341 = sbr.rel (%p1339) target = $region52
      $region51: #{residual_block_forward.1} parent=47 // pred_region
        _
      $region52: #{residual_block_forward.1} parent=47 // pred_fallthru
        _
    $region48: #{residual_block_forward.1} parent=5 // pred_fallthru
      _
    %p1342 = scmp.le.s32.totalorder 2, %s13
    // Predicated region
    $region53: #{residual_block_forward.1} parent=5 // pred_check
      %p1343 = pneg %p1342
    $region54: #{residual_block_forward.1} parent=5 // pred_check_branch
      %1345 = sbr.rel (%p1343) target = $region56
    $region55: #{residual_block_forward.1} parent=5 // pred_region
      %s1346 = ssub.s32 %s13, 2
      // Predicated region
      $region57: #{residual_block_forward.1} parent=55 // pred_check
        %p1347 = pneg %p194
      $region58: #{residual_block_forward.1} parent=55 // pred_check_branch
        %1349 = sbr.rel (%p1347) target = $region60
      $region59: #{residual_block_forward.1} parent=55 // pred_region
        %p1350 = scmp.lt.s32.totalorder %s19, 1
        %s1351 = scalar_select %p1350, %s19, 1
        %s1352 = smul.addr %s1351, 4
        %s1353 = scalar_lea.vmem %s7, %s1352
      $region60: #{residual_block_forward.1} parent=55 // pred_fallthru
        _
    $region56: #{residual_block_forward.1} parent=5 // pred_fallthru
      _
  $region6: #{residual_block_forward.1} parent=0 // loop_footer
    %s17 = sadd.s32 1, %s13
  $region7: #{residual_block_forward.1} parent=0 // loop_footer_branch
    %12 = sbr.rel target = $region3
  $region8: #{residual_block_forward.1} parent=0 // loop_exit
    _

</llo_original>
